<compile_context>
chip_gen: v7x
topology: tpu7x:2x2x1
jax: 0.10.0
libtpu: 0.0.40
codegen_flags: <defaults>
</compile_context>

<pallas_src>
from functools import partial

import jax
import jax.numpy as jnp
from jax import lax
from jax.experimental import pallas as pl
from jax.experimental.pallas import tpu as pltpu


def _pick_block_batch(n, per_image_bytes, budget=4 << 20, min_steps=4):
    """Images per grid step: as large as the VMEM budget allows, but keep at
    least `min_steps` grid steps when n is large enough (pipelining / v7x
    megacore).  Always returns a divisor of n."""
    divisors = [d for d in range(1, n + 1) if n % d == 0]
    fits = [d for d in divisors if d * per_image_bytes <= budget] or [1]
    pipelined = [d for d in fits if n // d >= min_steps]
    return max(pipelined) if pipelined else max(fits)


def _make_conv_kernel(D, use_arch, C_out, H, W, ksize, padding, stride,
                      bs, fuse_taps, compute_dtype):
    """ReLU(weighted sum) -> fused depthwise+pointwise conv (+ fused stride
    subsample) -> merged partial BN stats, for `bs` images per grid step."""
    M = H * W
    taps = [(t // ksize - padding, t % ksize - padding)
            for t in range(ksize * ksize)]

    def kernel(*refs):
        i = 0
        x_refs = refs[i:i + D]; i += D
        sig_ref = None
        if use_arch:
            sig_ref = refs[i]; i += 1
        mask_ref = refs[i]; i += 1          # (k*k, 1, M) per-tap validity masks
        wf_ref = refs[i]; i += 1            # fused conv weight (see wrapper)
        sel_ref = None
        if stride > 1:
            sel_ref = refs[i]; i += 1       # (M, Mo) 0/1 strided-selection matrix
        y_ref, stats_ref = refs[i], refs[i + 1]

        s_sum = jnp.zeros((C_out, 1), jnp.float32)
        s_sq = jnp.zeros((C_out, 1), jnp.float32)

        # TODO(synk): switch this unrolled Python loop to lax.fori_loop if bs
        # ever gets large enough for live ranges to matter.
        for b in range(bs):
            # ---- weighted sum of the D inputs (SMEM sigmoid scalars) + ReLU -
            if use_arch:
                xb = x_refs[0][b] * sig_ref[0]
                for d in range(1, D):
                    xb = xb + x_refs[d][b] * sig_ref[d]
            else:
                xb = x_refs[0][b]
            xb = jnp.maximum(xb, 0.0)                      # (C_in, M), f32

            # ---- im2col via lane roll + boundary mask (in-kernel padding) ---
            if fuse_taps:
                pieces = []
                for t, (oy, ox) in enumerate(taps):
                    off = oy * W + ox
                    sh = xb if off == 0 else pltpu.roll(xb, shift=(-off) % M, axis=1)
                    if not (oy == 0 and ox == 0):          # center mask == all ones
                        sh = sh * mask_ref[t]
                    pieces.append(sh)
                # Cast only the concatenated operand (keeps per-tap VPU math f32).
                patch = jnp.concatenate(pieces, axis=0).astype(compute_dtype)
                yb = jnp.dot(wf_ref[...], patch,
                             preferred_element_type=jnp.float32)   # (C_out, M)
            else:
                # Per-tap accumulating matmuls: no (k*k*C_in, M) patch in VMEM
                # (v7x MRB accumulates in place).
                yb = jnp.zeros((C_out, M), jnp.float32)
                for t, (oy, ox) in enumerate(taps):
                    off = oy * W + ox
                    sh = xb if off == 0 else pltpu.roll(xb, shift=(-off) % M, axis=1)
                    if not (oy == 0 and ox == 0):
                        sh = sh * mask_ref[t]
                    yb = yb + jnp.dot(wf_ref[t], sh.astype(compute_dtype),
                                      preferred_element_type=jnp.float32)

            # ---- fused stride subsample (0/1 selection matmul, lane-dense) --
            if stride > 1:
                yb = jnp.dot(yb, sel_ref[...],
                             preferred_element_type=jnp.float32)   # (C_out, Mo)

            y_ref[b] = yb
            s_sum = s_sum + jnp.sum(yb, axis=1, keepdims=True)
            s_sq = s_sq + jnp.sum(yb * yb, axis=1, keepdims=True)

        # Single merged (C_out, 2) partial-stats store per grid step.
        stats_ref[0] = jnp.concatenate([s_sum, s_sq], axis=1)

    return kernel


def _bn_kernel(y_ref, scale_ref, shift_ref, o_ref):
    """Fused BatchNorm affine: one lane-dense y*scale + shift pass."""
    o_ref[...] = y_ref[...] * scale_ref[...] + shift_ref[...]


@partial(jax.jit, static_argnames=("stride", "padding", "eps", "compute_dtype",
                                   "fuse_taps", "images_per_step"))
def triplet_forward(inputs_nchw, arch_parm, w_dw, w_pw, gamma, beta,
                    stride=1, padding=1, eps=1e-5,
                    compute_dtype=jnp.float32, fuse_taps=None,
                    images_per_step=None):
    """arch_parm=None corresponds to in_degree == 0 (use inputs[0] directly)."""
    use_arch = arch_parm is not None
    if not use_arch:
        inputs_nchw = inputs_nchw[:1]
    D = len(inputs_nchw)
    N, C_in, H, W = inputs_nchw[0].shape
    C_out = w_pw.shape[0]
    ksize = w_dw.shape[-1]
    if ksize != 2 * padding + 1:
        # TODO(synk): general (kernel_size, padding) combos; module default is k=3, p=1.
        raise NotImplementedError("requires kernel_size == 2*padding + 1")
    Ho = (H + 2 * padding - ksize) // stride + 1
    Wo = (W + 2 * padding - ksize) // stride + 1
    M, Mo, KK = H * W, Ho * Wo, ksize * ksize

    if fuse_taps is None:
        # Fused single K=k*k*C_in matmul unless the im2col patch would get big
        # (v7x: 64 MiB VMEM) -> per-tap accumulating matmuls instead.
        fuse_taps = (KK * C_in * M * 4) <= (2 << 20)

    # NCHW -> (N, C_in, H*W): free row-major reshape.  No transpose, no jnp.pad.
    xs = [x.reshape(N, C_in, M).astype(jnp.float32) for x in inputs_nchw]

    # Fused depthwise*pointwise weight: wf[o, t*C_in + c] = dw[c, t] * pw[o, c].
    dw2 = w_dw[:, 0].reshape(C_in, KK).astype(jnp.float32)           # (C_in, k*k)
    pw2 = w_pw[:, :, 0, 0].astype(jnp.float32)                       # (C_out, C_in)
    wf_full = pw2[:, None, :] * jnp.transpose(dw2)[None, :, :]       # (C_out, k*k, C_in)
    if fuse_taps:
        wf = wf_full.reshape(C_out, KK * C_in).astype(compute_dtype)
    else:
        wf = jnp.transpose(wf_full, (1, 0, 2)).astype(compute_dtype)  # (k*k, C_out, C_in)

    # Per-tap boundary masks (the conv zero padding, applied in-kernel).
    hh = jnp.arange(H)[:, None]
    ww = jnp.arange(W)[None, :]
    mask_list = []
    for t in range(KK):
        oy, ox = t // ksize - padding, t % ksize - padding
        m = (hh + oy >= 0) & (hh + oy < H) & (ww + ox >= 0) & (ww + ox < W)
        mask_list.append(m.reshape(1, M))
    masks = jnp.stack(mask_list, axis=0).astype(jnp.float32)          # (k*k, 1, M)

    # Images per grid step (amortize per-step pipeline overhead).
    per_img = 4 * (D * C_in * M + C_out * Mo)
    bs = images_per_step if images_per_step is not None else _pick_block_batch(N, per_img)
    assert N % bs == 0, (N, bs)
    steps = N // bs

    args = list(xs)
    in_specs = [pl.BlockSpec((bs, C_in, M), lambda n: (n, 0, 0))] * D
    if use_arch:
        args.append(jax.nn.sigmoid(arch_parm).astype(jnp.float32))
        in_specs.append(pl.BlockSpec(memory_space=pltpu.MemorySpace.SMEM))
    args += [masks, wf]
    in_specs += [pl.BlockSpec((KK, 1, M), lambda n: (0, 0, 0))]
    if fuse_taps:
        in_specs += [pl.BlockSpec((C_out, KK * C_in), lambda n: (0, 0))]
    else:
        in_specs += [pl.BlockSpec((KK, C_out, C_in), lambda n: (0, 0, 0))]
    if stride > 1:
        # 0/1 selection matrix mapping full-res columns -> strided output columns.
        src = (jnp.arange(Ho)[:, None] * stride * W
               + jnp.arange(Wo)[None, :] * stride).reshape(-1)        # (Mo,)
        sel = (jnp.arange(M)[:, None] == src[None, :]).astype(jnp.float32)  # (M, Mo)
        args.append(sel)
        in_specs.append(pl.BlockSpec((M, Mo), lambda n: (0, 0)))

    conv_kernel = _make_conv_kernel(D, use_arch, C_out, H, W, ksize, padding,
                                    stride, bs, fuse_taps, compute_dtype)

    # VMEM limit derived from the actual block sizes (clamped to 64 MiB -> safe on v7x).
    witem = jnp.dtype(compute_dtype).itemsize
    block_bytes = (4 * D * bs * C_in * M + 4 * KK * M + 4 * bs * C_out * Mo
                   + 8 * C_out + witem * C_out * KK * C_in
                   + (4 * M * Mo if stride > 1 else 0))
    work_bytes = 4 * (KK * C_in * M + 2 * C_out * M)
    vmem_limit = int(min(max(4 * block_bytes + work_bytes, 32 * 2 ** 20), 64 * 2 ** 20))
    cparams = pltpu.CompilerParams(dimension_semantics=("parallel",),
                                   vmem_limit_bytes=vmem_limit)

    # Phase 1: fused ReLU + conv (+ fused stride subsample), batch-parallel grid,
    # emitting the (already strided) conv output plus merged per-step BN partials.
    y, stats = pl.pallas_call(
        conv_kernel,
        grid=(steps,),
        in_specs=in_specs,
        out_specs=(pl.BlockSpec((bs, C_out, Mo), lambda n: (n, 0, 0)),
                   pl.BlockSpec((1, C_out, 2), lambda n: (n, 0, 0))),
        out_shape=(jax.ShapeDtypeStruct((N, C_out, Mo), jnp.float32),
                   jax.ShapeDtypeStruct((steps, C_out, 2), jnp.float32)),
        compiler_params=cparams,
    )(*args)

    # Finalize global BatchNorm stats (tiny per-channel math) into scale/shift.
    # TODO(synk): two-pass centered variance (sum of (y-mean)^2) if |mean| >> std
    # for real activations; E[y^2]-E[y]^2 can cancel catastrophically.
    count = N * Mo
    tot = jnp.sum(stats, axis=0)                                       # (C_out, 2)
    mean = tot[:, 0] / count
    var = jnp.maximum(tot[:, 1] / count - mean * mean, 0.0)            # biased var
    scale = gamma.astype(jnp.float32) * lax.rsqrt(var + eps)
    shift = beta.astype(jnp.float32) - mean * scale

    # Phase 2: fused normalize, lane-dense (last dim = C_out*Mo >= 128 lanes even
    # for the stride-2 case), in-place over the phase-1 output.
    # TODO(synk): fully-fused single-call variant keeping y resident in VMEM
    # (removes the intermediate HBM write/read) when N*C_out*Mo*4B fits VMEM.
    L = C_out * Mo
    bs2 = images_per_step if images_per_step is not None else _pick_block_batch(N, 8 * L)
    assert N % bs2 == 0, (N, bs2)
    steps2 = N // bs2
    y3 = y.reshape(steps2, bs2, L)                                     # free reshape
    scale3 = jnp.broadcast_to(scale[:, None], (C_out, Mo)).reshape(1, 1, L)
    shift3 = jnp.broadcast_to(shift[:, None], (C_out, Mo)).reshape(1, 1, L)

    out = pl.pallas_call(
        _bn_kernel,
        grid=(steps2,),
        in_specs=[pl.BlockSpec((1, bs2, L), lambda n: (n, 0, 0)),
                  pl.BlockSpec((1, 1, L), lambda n: (0, 0, 0)),
                  pl.BlockSpec((1, 1, L), lambda n: (0, 0, 0))],
        out_specs=pl.BlockSpec((1, bs2, L), lambda n: (n, 0, 0)),
        out_shape=jax.ShapeDtypeStruct((steps2, bs2, L), jnp.float32),
        input_output_aliases={0: 0},
        compiler_params=pltpu.CompilerParams(dimension_semantics=("parallel",),
                                             vmem_limit_bytes=vmem_limit),
    )(y3, scale3, shift3)

    # (N, C_out, Ho*Wo) is already NCHW order -> free reshape, no transpose.
    return out.reshape(N, C_out, Ho, Wo)


def triplet_reference(inputs_nchw, arch_parm, w_dw, w_pw, gamma, beta,
                      stride=1, padding=1, eps=1e-5):
    """Pure-JAX reference matching the PyTorch forward (NCHW)."""
    if arch_parm is not None:
        sig = jax.nn.sigmoid(arch_parm)
        x = sum(sig[i] * inputs_nchw[i] for i in range(len(inputs_nchw)))
    else:
        x = inputs_nchw[0]
    x = jnp.maximum(x, 0.0)
    C_in = x.shape[1]
    y = lax.conv_general_dilated(
        x, w_dw, (stride, stride), [(padding, padding)] * 2,
        feature_group_count=C_in,
        dimension_numbers=('NCHW', 'OIHW', 'NCHW'))
    y = lax.conv_general_dilated(
        y, w_pw, (1, 1), 'VALID',
        dimension_numbers=('NCHW', 'OIHW', 'NCHW'))
    mean = jnp.mean(y, axis=(0, 2, 3), keepdims=True)
    var = jnp.mean((y - mean) ** 2, axis=(0, 2, 3), keepdims=True)
    y = (y - mean) / jnp.sqrt(var + eps)
    return y * gamma.reshape(1, -1, 1, 1) + beta.reshape(1, -1, 1, 1)


if __name__ == "__main__":
    key = jax.random.PRNGKey(0)
    D, N, C_in, C_out, H, W = 2, 2, 8, 16, 16, 16
    ksize, padding = 3, 1
    ks = jax.random.split(key, 7)

    inputs = [jax.random.normal(ks[i], (N, C_in, H, W), jnp.float32)
              for i in range(D)]
    # PyTorch inits arch_parm to zeros; use small deterministic random values so
    # the weighted-sum path is non-degenerate.
    arch_parm = 0.1 * jax.random.normal(ks[2], (D,), jnp.float32)
    w_dw = 0.2 * jax.random.normal(ks[3], (C_in, 1, ksize, ksize), jnp.float32)
    w_pw = 0.2 * jax.random.normal(ks[4], (C_out, C_in, 1, 1), jnp.float32)
    gamma = 1.0 + 0.1 * jax.random.normal(ks[5], (C_out,), jnp.float32)
    beta = 0.1 * jax.random.normal(ks[6], (C_out,), jnp.float32)

    def check(out, ref, atol, rtol):
        assert out.shape == ref.shape, (out.shape, ref.shape)
        err = float(jnp.max(jnp.abs(out - ref)))
        assert jnp.allclose(out, ref, atol=atol, rtol=rtol), err

    # case 1: in_degree = D, stride 1 (normal cell), fused-K matmul, f32 MXU
    out = jax.block_until_ready(triplet_forward(
        inputs, arch_parm, w_dw, w_pw, gamma, beta, stride=1, padding=padding))
    ref = triplet_reference(inputs, arch_parm, w_dw, w_pw, gamma, beta,
                            stride=1, padding=padding)
    assert out.shape == (N, C_out, H, W)
    check(out, ref, 1e-4, 1e-4)

    # case 2: in_degree = 0 (no arch weighting)
    out0 = jax.block_until_ready(triplet_forward(
        inputs, None, w_dw, w_pw, gamma, beta, stride=1, padding=padding))
    ref0 = triplet_reference(inputs, None, w_dw, w_pw, gamma, beta,
                             stride=1, padding=padding)
    check(out0, ref0, 1e-4, 1e-4)

    # case 3: stride 2 (reduction cell) -- subsample fused into phase 1
    out2 = jax.block_until_ready(triplet_forward(
        inputs, arch_parm, w_dw, w_pw, gamma, beta, stride=2, padding=padding))
    ref2 = triplet_reference(inputs, arch_parm, w_dw, w_pw, gamma, beta,
                             stride=2, padding=padding)
    assert out2.shape == (N, C_out, H // 2, W // 2)
    check(out2, ref2, 1e-4, 1e-4)

    # case 4: per-tap accumulating matmul path (v7x-style, no im2col patch)
    out3 = jax.block_until_ready(triplet_forward(
        inputs, arch_parm, w_dw, w_pw, gamma, beta, stride=2, padding=padding,
        fuse_taps=False))
    check(out3, ref2, 1e-4, 1e-4)

    # case 5: bf16 MXU operands (f32 accumulation) -- looser tolerance by design
    outb = jax.block_until_ready(triplet_forward(
        inputs, arch_parm, w_dw, w_pw, gamma, beta, stride=1, padding=padding,
        compute_dtype=jnp.bfloat16))
    check(outb, ref, 5e-2, 5e-2)

    print("KERNEL_OK")
</pallas_src>

<mosaic_0001>
module attributes {stable_mosaic.version = 11 : i64} {
  func.func @kernel(%arg0: i32, %arg1: memref<2x8x256xf32, #tpu.memory_space<vmem>>, %arg2: memref<2x8x256xf32, #tpu.memory_space<vmem>>, %arg3: memref<2xf32, #tpu.memory_space<smem>>, %arg4: memref<9x1x256xf32, #tpu.memory_space<vmem>>, %arg5: memref<16x72xf32, #tpu.memory_space<vmem>>, %arg6: memref<2x16x256xf32, #tpu.memory_space<vmem>>, %arg7: memref<1x16x2xf32, #tpu.memory_space<vmem>>) attributes {dimension_semantics = [#tpu.dimension_semantics<parallel>], iteration_bounds = array<i64: 1>, scalar_prefetch = 0 : i64, scratch_operands = 0 : i64, tpu.core_type = #tpu.core_type<tc>, window_params = [{transform_indices = @transform_0, window_bounds = array<i64: 2, 8, 256>}, {transform_indices = @transform_1, window_bounds = array<i64: 2, 8, 256>}, {transform_indices = @transform_2, window_bounds = array<i64: 2>}, {pipeline_mode = #tpu.pipeline_mode<synchronous>, transform_indices = @transform_3, window_bounds = array<i64: 9, 1, 256>}, {pipeline_mode = #tpu.pipeline_mode<synchronous>, transform_indices = @transform_4, window_bounds = array<i64: 16, 72>}, {transform_indices = @transform_5, window_bounds = array<i64: 2, 16, 256>}, {transform_indices = @transform_6, window_bounds = array<i64: 1, 16, 2>}]} {
    %cst = arith.constant 0.000000e+00 : f32
    %0 = vector.broadcast %cst : f32 to vector<16x1xf32>
    %cst_0 = arith.constant 0.000000e+00 : f32
    %1 = vector.broadcast %cst_0 : f32 to vector<16x1xf32>
    %c0 = arith.constant 0 : index
    %c0_1 = arith.constant 0 : index
    %c0_2 = arith.constant 0 : index
    %2 = vector.load %arg1[%c0, %c0_1, %c0_2] : memref<2x8x256xf32, #tpu.memory_space<vmem>>, vector<1x8x256xf32>
    %3 = vector.shape_cast %2 : vector<1x8x256xf32> to vector<8x256xf32>
    %c0_3 = arith.constant 0 : index
    %4 = memref.load %arg3[%c0_3] : memref<2xf32, #tpu.memory_space<smem>>
    %5 = vector.broadcast %4 : f32 to vector<8x256xf32>
    %6 = arith.mulf %3, %5 : vector<8x256xf32>
    %c0_4 = arith.constant 0 : index
    %c0_5 = arith.constant 0 : index
    %c0_6 = arith.constant 0 : index
    %7 = vector.load %arg2[%c0_4, %c0_5, %c0_6] : memref<2x8x256xf32, #tpu.memory_space<vmem>>, vector<1x8x256xf32>
    %8 = vector.shape_cast %7 : vector<1x8x256xf32> to vector<8x256xf32>
    %c1 = arith.constant 1 : index
    %9 = memref.load %arg3[%c1] : memref<2xf32, #tpu.memory_space<smem>>
    %10 = vector.broadcast %9 : f32 to vector<8x256xf32>
    %11 = arith.mulf %8, %10 : vector<8x256xf32>
    %12 = arith.addf %6, %11 : vector<8x256xf32>
    %cst_7 = arith.constant 0.000000e+00 : f32
    %13 = vector.broadcast %cst_7 : f32 to vector<8x256xf32>
    %14 = arith.maximumf %12, %13 : vector<8x256xf32>
    %c17_i32 = arith.constant 17 : i32
    %15 = tpu.dynamic_rotate %14 by %c17_i32 dim 1 : vector<8x256xf32>, i32 -> vector<8x256xf32>
    %c0_8 = arith.constant 0 : index
    %c0_9 = arith.constant 0 : index
    %c0_10 = arith.constant 0 : index
    %16 = vector.load %arg4[%c0_8, %c0_9, %c0_10] : memref<9x1x256xf32, #tpu.memory_space<vmem>>, vector<1x1x256xf32>
    %17 = vector.shape_cast %16 : vector<1x1x256xf32> to vector<1x256xf32>
    %18 = vector.broadcast %17 : vector<1x256xf32> to vector<8x256xf32>
    %19 = arith.mulf %15, %18 : vector<8x256xf32>
    %c16_i32 = arith.constant 16 : i32
    %20 = tpu.dynamic_rotate %14 by %c16_i32 dim 1 : vector<8x256xf32>, i32 -> vector<8x256xf32>
    %c1_11 = arith.constant 1 : index
    %c0_12 = arith.constant 0 : index
    %c0_13 = arith.constant 0 : index
    %21 = vector.load %arg4[%c1_11, %c0_12, %c0_13] : memref<9x1x256xf32, #tpu.memory_space<vmem>>, vector<1x1x256xf32>
    %22 = vector.shape_cast %21 : vector<1x1x256xf32> to vector<1x256xf32>
    %23 = vector.broadcast %22 : vector<1x256xf32> to vector<8x256xf32>
    %24 = arith.mulf %20, %23 : vector<8x256xf32>
    %c15_i32 = arith.constant 15 : i32
    %25 = tpu.dynamic_rotate %14 by %c15_i32 dim 1 : vector<8x256xf32>, i32 -> vector<8x256xf32>
    %c2 = arith.constant 2 : index
    %c0_14 = arith.constant 0 : index
    %c0_15 = arith.constant 0 : index
    %26 = vector.load %arg4[%c2, %c0_14, %c0_15] : memref<9x1x256xf32, #tpu.memory_space<vmem>>, vector<1x1x256xf32>
    %27 = vector.shape_cast %26 : vector<1x1x256xf32> to vector<1x256xf32>
    %28 = vector.broadcast %27 : vector<1x256xf32> to vector<8x256xf32>
    %29 = arith.mulf %25, %28 : vector<8x256xf32>
    %c1_i32 = arith.constant 1 : i32
    %30 = tpu.dynamic_rotate %14 by %c1_i32 dim 1 : vector<8x256xf32>, i32 -> vector<8x256xf32>
    %c3 = arith.constant 3 : index
    %c0_16 = arith.constant 0 : index
    %c0_17 = arith.constant 0 : index
    %31 = vector.load %arg4[%c3, %c0_16, %c0_17] : memref<9x1x256xf32, #tpu.memory_space<vmem>>, vector<1x1x256xf32>
    %32 = vector.shape_cast %31 : vector<1x1x256xf32> to vector<1x256xf32>
    %33 = vector.broadcast %32 : vector<1x256xf32> to vector<8x256xf32>
    %34 = arith.mulf %30, %33 : vector<8x256xf32>
    %c255_i32 = arith.constant 255 : i32
    %35 = tpu.dynamic_rotate %14 by %c255_i32 dim 1 : vector<8x256xf32>, i32 -> vector<8x256xf32>
    %c5 = arith.constant 5 : index
    %c0_18 = arith.constant 0 : index
    %c0_19 = arith.constant 0 : index
    %36 = vector.load %arg4[%c5, %c0_18, %c0_19] : memref<9x1x256xf32, #tpu.memory_space<vmem>>, vector<1x1x256xf32>
    %37 = vector.shape_cast %36 : vector<1x1x256xf32> to vector<1x256xf32>
    %38 = vector.broadcast %37 : vector<1x256xf32> to vector<8x256xf32>
    %39 = arith.mulf %35, %38 : vector<8x256xf32>
    %c241_i32 = arith.constant 241 : i32
    %40 = tpu.dynamic_rotate %14 by %c241_i32 dim 1 : vector<8x256xf32>, i32 -> vector<8x256xf32>
    %c6 = arith.constant 6 : index
    %c0_20 = arith.constant 0 : index
    %c0_21 = arith.constant 0 : index
    %41 = vector.load %arg4[%c6, %c0_20, %c0_21] : memref<9x1x256xf32, #tpu.memory_space<vmem>>, vector<1x1x256xf32>
    %42 = vector.shape_cast %41 : vector<1x1x256xf32> to vector<1x256xf32>
    %43 = vector.broadcast %42 : vector<1x256xf32> to vector<8x256xf32>
    %44 = arith.mulf %40, %43 : vector<8x256xf32>
    %c240_i32 = arith.constant 240 : i32
    %45 = tpu.dynamic_rotate %14 by %c240_i32 dim 1 : vector<8x256xf32>, i32 -> vector<8x256xf32>
    %c7 = arith.constant 7 : index
    %c0_22 = arith.constant 0 : index
    %c0_23 = arith.constant 0 : index
    %46 = vector.load %arg4[%c7, %c0_22, %c0_23] : memref<9x1x256xf32, #tpu.memory_space<vmem>>, vector<1x1x256xf32>
    %47 = vector.shape_cast %46 : vector<1x1x256xf32> to vector<1x256xf32>
    %48 = vector.broadcast %47 : vector<1x256xf32> to vector<8x256xf32>
    %49 = arith.mulf %45, %48 : vector<8x256xf32>
    %c239_i32 = arith.constant 239 : i32
    %50 = tpu.dynamic_rotate %14 by %c239_i32 dim 1 : vector<8x256xf32>, i32 -> vector<8x256xf32>
    %c8 = arith.constant 8 : index
    %c0_24 = arith.constant 0 : index
    %c0_25 = arith.constant 0 : index
    %51 = vector.load %arg4[%c8, %c0_24, %c0_25] : memref<9x1x256xf32, #tpu.memory_space<vmem>>, vector<1x1x256xf32>
    %52 = vector.shape_cast %51 : vector<1x1x256xf32> to vector<1x256xf32>
    %53 = vector.broadcast %52 : vector<1x256xf32> to vector<8x256xf32>
    %54 = arith.mulf %50, %53 : vector<8x256xf32>
    %55 = tpu.concatenate %19, %24, %29, %34, %14, %39, %44, %49, %54 in 0 : vector<8x256xf32>, vector<8x256xf32>, vector<8x256xf32>, vector<8x256xf32>, vector<8x256xf32>, vector<8x256xf32>, vector<8x256xf32>, vector<8x256xf32>, vector<8x256xf32> -> vector<72x256xf32>
    %c0_26 = arith.constant 0 : index
    %c0_27 = arith.constant 0 : index
    %56 = vector.load %arg5[%c0_26, %c0_27] : memref<16x72xf32, #tpu.memory_space<vmem>>, vector<16x72xf32>
    %cst_28 = arith.constant dense<0.000000e+00> : vector<16x256xf32>
    %57 = tpu.matmul %56, %55, %cst_28 {dimension_numbers = #tpu.dot_dimension_numbers<[1], [0], [0], [1], [0, 0, 1, 1], [], []>} : vector<16x72xf32>, vector<72x256xf32>, vector<16x256xf32> -> vector<16x256xf32>
    %c0_29 = arith.constant 0 : index
    %c0_30 = arith.constant 0 : index
    %c0_31 = arith.constant 0 : index
    %58 = vector.load %arg6[%c0_29, %c0_30, %c0_31] : memref<2x16x256xf32, #tpu.memory_space<vmem>>, vector<1x16x256xf32>
    %59 = vector.shape_cast %58 : vector<1x16x256xf32> to vector<16x256xf32>
    %60 = vector.shape_cast %57 : vector<16x256xf32> to vector<1x16x256xf32>
    tpu.vector_store %arg6[%c0_29, %c0_30, %c0_31], %60 {strides = array<i32>} : memref<2x16x256xf32, #tpu.memory_space<vmem>>, vector<1x16x256xf32>,
    %cst_32 = arith.constant dense<0.000000e+00> : vector<16xf32>
    %61 = vector.multi_reduction <add>, %57, %cst_32 [1] : vector<16x256xf32> to vector<16xf32>
    %62 = vector.shape_cast %61 : vector<16xf32> to vector<16x1xf32>
    %63 = arith.addf %0, %62 : vector<16x1xf32>
    %64 = arith.mulf %57, %57 : vector<16x256xf32>
    %cst_33 = arith.constant dense<0.000000e+00> : vector<16xf32>
    %65 = vector.multi_reduction <add>, %64, %cst_33 [1] : vector<16x256xf32> to vector<16xf32>
    %66 = vector.shape_cast %65 : vector<16xf32> to vector<16x1xf32>
    %67 = arith.addf %1, %66 : vector<16x1xf32>
    %c1_34 = arith.constant 1 : index
    %c0_35 = arith.constant 0 : index
    %c0_36 = arith.constant 0 : index
    %68 = vector.load %arg1[%c1_34, %c0_35, %c0_36] : memref<2x8x256xf32, #tpu.memory_space<vmem>>, vector<1x8x256xf32>
    %69 = vector.shape_cast %68 : vector<1x8x256xf32> to vector<8x256xf32>
    %c0_37 = arith.constant 0 : index
    %70 = memref.load %arg3[%c0_37] : memref<2xf32, #tpu.memory_space<smem>>
    %71 = vector.broadcast %70 : f32 to vector<8x256xf32>
    %72 = arith.mulf %69, %71 : vector<8x256xf32>
    %c1_38 = arith.constant 1 : index
    %c0_39 = arith.constant 0 : index
    %c0_40 = arith.constant 0 : index
    %73 = vector.load %arg2[%c1_38, %c0_39, %c0_40] : memref<2x8x256xf32, #tpu.memory_space<vmem>>, vector<1x8x256xf32>
    %74 = vector.shape_cast %73 : vector<1x8x256xf32> to vector<8x256xf32>
    %c1_41 = arith.constant 1 : index
    %75 = memref.load %arg3[%c1_41] : memref<2xf32, #tpu.memory_space<smem>>
    %76 = vector.broadcast %75 : f32 to vector<8x256xf32>
    %77 = arith.mulf %74, %76 : vector<8x256xf32>
    %78 = arith.addf %72, %77 : vector<8x256xf32>
    %cst_42 = arith.constant 0.000000e+00 : f32
    %79 = vector.broadcast %cst_42 : f32 to vector<8x256xf32>
    %80 = arith.maximumf %78, %79 : vector<8x256xf32>
    %c17_i32_43 = arith.constant 17 : i32
    %81 = tpu.dynamic_rotate %80 by %c17_i32_43 dim 1 : vector<8x256xf32>, i32 -> vector<8x256xf32>
    %c0_44 = arith.constant 0 : index
    %c0_45 = arith.constant 0 : index
    %c0_46 = arith.constant 0 : index
    %82 = vector.load %arg4[%c0_44, %c0_45, %c0_46] : memref<9x1x256xf32, #tpu.memory_space<vmem>>, vector<1x1x256xf32>
    %83 = vector.shape_cast %82 : vector<1x1x256xf32> to vector<1x256xf32>
    %84 = vector.broadcast %83 : vector<1x256xf32> to vector<8x256xf32>
    %85 = arith.mulf %81, %84 : vector<8x256xf32>
    %c16_i32_47 = arith.constant 16 : i32
    %86 = tpu.dynamic_rotate %80 by %c16_i32_47 dim 1 : vector<8x256xf32>, i32 -> vector<8x256xf32>
    %c1_48 = arith.constant 1 : index
    %c0_49 = arith.constant 0 : index
    %c0_50 = arith.constant 0 : index
    %87 = vector.load %arg4[%c1_48, %c0_49, %c0_50] : memref<9x1x256xf32, #tpu.memory_space<vmem>>, vector<1x1x256xf32>
    %88 = vector.shape_cast %87 : vector<1x1x256xf32> to vector<1x256xf32>
    %89 = vector.broadcast %88 : vector<1x256xf32> to vector<8x256xf32>
    %90 = arith.mulf %86, %89 : vector<8x256xf32>
    %c15_i32_51 = arith.constant 15 : i32
    %91 = tpu.dynamic_rotate %80 by %c15_i32_51 dim 1 : vector<8x256xf32>, i32 -> vector<8x256xf32>
    %c2_52 = arith.constant 2 : index
    %c0_53 = arith.constant 0 : index
    %c0_54 = arith.constant 0 : index
    %92 = vector.load %arg4[%c2_52, %c0_53, %c0_54] : memref<9x1x256xf32, #tpu.memory_space<vmem>>, vector<1x1x256xf32>
    %93 = vector.shape_cast %92 : vector<1x1x256xf32> to vector<1x256xf32>
    %94 = vector.broadcast %93 : vector<1x256xf32> to vector<8x256xf32>
    %95 = arith.mulf %91, %94 : vector<8x256xf32>
    %c1_i32_55 = arith.constant 1 : i32
    %96 = tpu.dynamic_rotate %80 by %c1_i32_55 dim 1 : vector<8x256xf32>, i32 -> vector<8x256xf32>
    %c3_56 = arith.constant 3 : index
    %c0_57 = arith.constant 0 : index
    %c0_58 = arith.constant 0 : index
    %97 = vector.load %arg4[%c3_56, %c0_57, %c0_58] : memref<9x1x256xf32, #tpu.memory_space<vmem>>, vector<1x1x256xf32>
    %98 = vector.shape_cast %97 : vector<1x1x256xf32> to vector<1x256xf32>
    %99 = vector.broadcast %98 : vector<1x256xf32> to vector<8x256xf32>
    %100 = arith.mulf %96, %99 : vector<8x256xf32>
    %c255_i32_59 = arith.constant 255 : i32
    %101 = tpu.dynamic_rotate %80 by %c255_i32_59 dim 1 : vector<8x256xf32>, i32 -> vector<8x256xf32>
    %c5_60 = arith.constant 5 : index
    %c0_61 = arith.constant 0 : index
    %c0_62 = arith.constant 0 : index
    %102 = vector.load %arg4[%c5_60, %c0_61, %c0_62] : memref<9x1x256xf32, #tpu.memory_space<vmem>>, vector<1x1x256xf32>
    %103 = vector.shape_cast %102 : vector<1x1x256xf32> to vector<1x256xf32>
    %104 = vector.broadcast %103 : vector<1x256xf32> to vector<8x256xf32>
    %105 = arith.mulf %101, %104 : vector<8x256xf32>
    %c241_i32_63 = arith.constant 241 : i32
    %106 = tpu.dynamic_rotate %80 by %c241_i32_63 dim 1 : vector<8x256xf32>, i32 -> vector<8x256xf32>
    %c6_64 = arith.constant 6 : index
    %c0_65 = arith.constant 0 : index
    %c0_66 = arith.constant 0 : index
    %107 = vector.load %arg4[%c6_64, %c0_65, %c0_66] : memref<9x1x256xf32, #tpu.memory_space<vmem>>, vector<1x1x256xf32>
    %108 = vector.shape_cast %107 : vector<1x1x256xf32> to vector<1x256xf32>
    %109 = vector.broadcast %108 : vector<1x256xf32> to vector<8x256xf32>
    %110 = arith.mulf %106, %109 : vector<8x256xf32>
    %c240_i32_67 = arith.constant 240 : i32
    %111 = tpu.dynamic_rotate %80 by %c240_i32_67 dim 1 : vector<8x256xf32>, i32 -> vector<8x256xf32>
    %c7_68 = arith.constant 7 : index
    %c0_69 = arith.constant 0 : index
    %c0_70 = arith.constant 0 : index
    %112 = vector.load %arg4[%c7_68, %c0_69, %c0_70] : memref<9x1x256xf32, #tpu.memory_space<vmem>>, vector<1x1x256xf32>
    %113 = vector.shape_cast %112 : vector<1x1x256xf32> to vector<1x256xf32>
    %114 = vector.broadcast %113 : vector<1x256xf32> to vector<8x256xf32>
    %115 = arith.mulf %111, %114 : vector<8x256xf32>
    %c239_i32_71 = arith.constant 239 : i32
    %116 = tpu.dynamic_rotate %80 by %c239_i32_71 dim 1 : vector<8x256xf32>, i32 -> vector<8x256xf32>
    %c8_72 = arith.constant 8 : index
    %c0_73 = arith.constant 0 : index
    %c0_74 = arith.constant 0 : index
    %117 = vector.load %arg4[%c8_72, %c0_73, %c0_74] : memref<9x1x256xf32, #tpu.memory_space<vmem>>, vector<1x1x256xf32>
    %118 = vector.shape_cast %117 : vector<1x1x256xf32> to vector<1x256xf32>
    %119 = vector.broadcast %118 : vector<1x256xf32> to vector<8x256xf32>
    %120 = arith.mulf %116, %119 : vector<8x256xf32>
    %121 = tpu.concatenate %85, %90, %95, %100, %80, %105, %110, %115, %120 in 0 : vector<8x256xf32>, vector<8x256xf32>, vector<8x256xf32>, vector<8x256xf32>, vector<8x256xf32>, vector<8x256xf32>, vector<8x256xf32>, vector<8x256xf32>, vector<8x256xf32> -> vector<72x256xf32>
    %c0_75 = arith.constant 0 : index
    %c0_76 = arith.constant 0 : index
    %122 = vector.load %arg5[%c0_75, %c0_76] : memref<16x72xf32, #tpu.memory_space<vmem>>, vector<16x72xf32>
    %cst_77 = arith.constant dense<0.000000e+00> : vector<16x256xf32>
    %123 = tpu.matmul %122, %121, %cst_77 {dimension_numbers = #tpu.dot_dimension_numbers<[1], [0], [0], [1], [0, 0, 1, 1], [], []>} : vector<16x72xf32>, vector<72x256xf32>, vector<16x256xf32> -> vector<16x256xf32>
    %c1_78 = arith.constant 1 : index
    %c0_79 = arith.constant 0 : index
    %c0_80 = arith.constant 0 : index
    %124 = vector.load %arg6[%c1_78, %c0_79, %c0_80] : memref<2x16x256xf32, #tpu.memory_space<vmem>>, vector<1x16x256xf32>
    %125 = vector.shape_cast %124 : vector<1x16x256xf32> to vector<16x256xf32>
    %126 = vector.shape_cast %123 : vector<16x256xf32> to vector<1x16x256xf32>
    tpu.vector_store %arg6[%c1_78, %c0_79, %c0_80], %126 {strides = array<i32>} : memref<2x16x256xf32, #tpu.memory_space<vmem>>, vector<1x16x256xf32>,
    %cst_81 = arith.constant dense<0.000000e+00> : vector<16xf32>
    %127 = vector.multi_reduction <add>, %123, %cst_81 [1] : vector<16x256xf32> to vector<16xf32>
    %128 = vector.shape_cast %127 : vector<16xf32> to vector<16x1xf32>
    %129 = arith.addf %63, %128 : vector<16x1xf32>
    %130 = arith.mulf %123, %123 : vector<16x256xf32>
    %cst_82 = arith.constant dense<0.000000e+00> : vector<16xf32>
    %131 = vector.multi_reduction <add>, %130, %cst_82 [1] : vector<16x256xf32> to vector<16xf32>
    %132 = vector.shape_cast %131 : vector<16xf32> to vector<16x1xf32>
    %133 = arith.addf %67, %132 : vector<16x1xf32>
    %134 = tpu.concatenate %129, %133 in 1 : vector<16x1xf32>, vector<16x1xf32> -> vector<16x2xf32>
    %c0_83 = arith.constant 0 : index
    %c0_84 = arith.constant 0 : index
    %c0_85 = arith.constant 0 : index
    %135 = vector.load %arg7[%c0_83, %c0_84, %c0_85] : memref<1x16x2xf32, #tpu.memory_space<vmem>>, vector<1x16x2xf32>
    %136 = vector.shape_cast %135 : vector<1x16x2xf32> to vector<16x2xf32>
    %137 = vector.shape_cast %134 : vector<16x2xf32> to vector<1x16x2xf32>
    tpu.vector_store %arg7[%c0_83, %c0_84, %c0_85], %137 {strides = array<i32>} : memref<1x16x2xf32, #tpu.memory_space<vmem>>, vector<1x16x2xf32>,
    return
  }
  func.func @transform_0(%arg0: i32) -> (i32, i32, i32) {
    %c0_i32 = arith.constant 0 : i32
    %c0_i32_0 = arith.constant 0 : i32
    %c0_i32_1 = arith.constant 0 : i32
    return %arg0, %c0_i32, %c0_i32_0 : i32, i32, i32
  }
  func.func @transform_1(%arg0: i32) -> (i32, i32, i32) {
    %c0_i32 = arith.constant 0 : i32
    %c0_i32_0 = arith.constant 0 : i32
    %c0_i32_1 = arith.constant 0 : i32
    return %arg0, %c0_i32, %c0_i32_0 : i32, i32, i32
  }
  func.func @transform_2(%arg0: i32) -> i32 {
    %c0_i32 = arith.constant 0 : i32
    %c0_i32_0 = arith.constant 0 : i32
    return %c0_i32 : i32
  }
  func.func @transform_3(%arg0: i32) -> (i32, i32, i32) {
    %c0_i32 = arith.constant 0 : i32
    %c0_i32_0 = arith.constant 0 : i32
    %c0_i32_1 = arith.constant 0 : i32
    %c0_i32_2 = arith.constant 0 : i32
    return %c0_i32, %c0_i32_0, %c0_i32_1 : i32, i32, i32
  }
  func.func @transform_4(%arg0: i32) -> (i32, i32) {
    %c0_i32 = arith.constant 0 : i32
    %c0_i32_0 = arith.constant 0 : i32
    %c0_i32_1 = arith.constant 0 : i32
    return %c0_i32, %c0_i32_0 : i32, i32
  }
  func.func @transform_5(%arg0: i32) -> (i32, i32, i32) {
    %c0_i32 = arith.constant 0 : i32
    %c0_i32_0 = arith.constant 0 : i32
    %c0_i32_1 = arith.constant 0 : i32
    return %arg0, %c0_i32, %c0_i32_0 : i32, i32, i32
  }
  func.func @transform_6(%arg0: i32) -> (i32, i32, i32) {
    %c0_i32 = arith.constant 0 : i32
    %c0_i32_0 = arith.constant 0 : i32
    %c0_i32_1 = arith.constant 0 : i32
    return %arg0, %c0_i32, %c0_i32_0 : i32, i32, i32
  }
}

module attributes {stable_mosaic.version = 11 : i64} {
  func.func @_bn_kernel(%arg0: i32, %arg1: memref<1x2x4096xf32, #tpu.memory_space<vmem>>, %arg2: memref<1x1x4096xf32, #tpu.memory_space<vmem>>, %arg3: memref<1x1x4096xf32, #tpu.memory_space<vmem>>, %arg4: memref<1x2x4096xf32, #tpu.memory_space<vmem>>) attributes {dimension_semantics = [#tpu.dimension_semantics<parallel>], iteration_bounds = array<i64: 1>, scalar_prefetch = 0 : i64, scratch_operands = 0 : i64, tpu.core_type = #tpu.core_type<tc>, window_params = [{transform_indices = @transform_0, window_bounds = array<i64: 1, 2, 4096>}, {pipeline_mode = #tpu.pipeline_mode<synchronous>, transform_indices = @transform_1, window_bounds = array<i64: 1, 1, 4096>}, {pipeline_mode = #tpu.pipeline_mode<synchronous>, transform_indices = @transform_2, window_bounds = array<i64: 1, 1, 4096>}, {transform_indices = @transform_3, window_bounds = array<i64: 1, 2, 4096>}]} {
    %c0 = arith.constant 0 : index
    %c0_0 = arith.constant 0 : index
    %c0_1 = arith.constant 0 : index
    %0 = vector.load %arg1[%c0, %c0_0, %c0_1] : memref<1x2x4096xf32, #tpu.memory_space<vmem>>, vector<1x2x4096xf32>
    %c0_2 = arith.constant 0 : index
    %c0_3 = arith.constant 0 : index
    %c0_4 = arith.constant 0 : index
    %1 = vector.load %arg2[%c0_2, %c0_3, %c0_4] : memref<1x1x4096xf32, #tpu.memory_space<vmem>>, vector<1x1x4096xf32>
    %2 = vector.broadcast %1 : vector<1x1x4096xf32> to vector<1x2x4096xf32>
    %3 = arith.mulf %0, %2 : vector<1x2x4096xf32>
    %c0_5 = arith.constant 0 : index
    %c0_6 = arith.constant 0 : index
    %c0_7 = arith.constant 0 : index
    %4 = vector.load %arg3[%c0_5, %c0_6, %c0_7] : memref<1x1x4096xf32, #tpu.memory_space<vmem>>, vector<1x1x4096xf32>
    %5 = vector.broadcast %4 : vector<1x1x4096xf32> to vector<1x2x4096xf32>
    %6 = arith.addf %3, %5 : vector<1x2x4096xf32>
    %c0_8 = arith.constant 0 : index
    %c0_9 = arith.constant 0 : index
    %c0_10 = arith.constant 0 : index
    %7 = vector.load %arg4[%c0_8, %c0_9, %c0_10] : memref<1x2x4096xf32, #tpu.memory_space<vmem>>, vector<1x2x4096xf32>
    tpu.vector_store %arg4[%c0_8, %c0_9, %c0_10], %6 {strides = array<i32>} : memref<1x2x4096xf32, #tpu.memory_space<vmem>>, vector<1x2x4096xf32>,
    return
  }
  func.func @transform_0(%arg0: i32) -> (i32, i32, i32) {
    %c0_i32 = arith.constant 0 : i32
    %c0_i32_0 = arith.constant 0 : i32
    %c0_i32_1 = arith.constant 0 : i32
    return %arg0, %c0_i32, %c0_i32_0 : i32, i32, i32
  }
  func.func @transform_1(%arg0: i32) -> (i32, i32, i32) {
    %c0_i32 = arith.constant 0 : i32
    %c0_i32_0 = arith.constant 0 : i32
    %c0_i32_1 = arith.constant 0 : i32
    %c0_i32_2 = arith.constant 0 : i32
    return %c0_i32, %c0_i32_0, %c0_i32_1 : i32, i32, i32
  }
  func.func @transform_2(%arg0: i32) -> (i32, i32, i32) {
    %c0_i32 = arith.constant 0 : i32
    %c0_i32_0 = arith.constant 0 : i32
    %c0_i32_1 = arith.constant 0 : i32
    %c0_i32_2 = arith.constant 0 : i32
    return %c0_i32, %c0_i32_0, %c0_i32_1 : i32, i32, i32
  }
  func.func @transform_3(%arg0: i32) -> (i32, i32, i32) {
    %c0_i32 = arith.constant 0 : i32
    %c0_i32_0 = arith.constant 0 : i32
    %c0_i32_1 = arith.constant 0 : i32
    return %arg0, %c0_i32, %c0_i32_0 : i32, i32, i32
  }
}

</mosaic_0001>

<llo_original>
// kernel: squeeze.4
$region0: #{squeeze.4}
  %s0 = inlined_call_operand.vmem [shape: f32[8,3,3], index: 0, kind: input, shape index: {}]
  %s1 = inlined_call_operand.vmem [shape: f32[8,9], index: 1, kind: output, shape index: {}]
  $region1: #{squeeze.4} parent=0
    #allocation0 [shape = 'u8[12288]{0}', space=vmem, size = 0x3000, scoped, tag = 'scoped mem for input reshape']
    %s3 = sshllo.u32 0, 4
    %s4 = smul.addr 4, 2
    %s5 = scalar_lea.vmem %s0, %s4
    %v6 = vld [vmem:[%s5] sm:%s3]
    %s7 = scalar_lea.vmem [#allocation0], 16
    %8 = vst [vmem:[%s7] sm:%s3] %v6
    %s9 = scalar_lea.vmem %s0, 4
    %v10 = vld [vmem:[%s9] sm:%s3]
    %s11 = scalar_lea.vmem [#allocation0], 8
    %12 = vst [vmem:[%s11] sm:%s3] %v10
    %v13 = vld [vmem:[%s0] sm:%s3]
    %14 = vst [vmem:[#allocation0] sm:%s3] %v13
    %v15 = vld [vmem:[#allocation0] sm:$0x7]
    %vm16 = vcmask 64512
    %17 = vst.msk [vmem:[%s1] sm:$0x7] %vm16, %v15
    %s18 = scalar_lea.vmem [#allocation0], 8
    %v19 = vld [vmem:[%s18] sm:$0x7]
    %vm20 = vcmask 64512
    %s21 = scalar_lea.vmem %s1, 3
    %22 = vst.msk [vmem:[%s21] sm:$0x7] %vm20, %v19
    %s23 = scalar_lea.vmem [#allocation0], 16
    %v24 = vld [vmem:[%s23] sm:$0x7]
    %vm25 = vcmask 64512
    %s26 = scalar_lea.vmem %s1, 6
    %27 = vst.msk [vmem:[%s26] sm:$0x7] %vm25, %v24

// kernel: triplet_forward.3
$region0: #{triplet_forward.3}
  #allocation0 [shape = 'u32[]', space=smem, size = 0x4, offset = 0x4, fixed_abs, tag = 'smem constant byte address 0x4 - core index']
  #allocation1 [shape = 'u32[144,128]{1,0:T(1,128)}', space=vmem, size = 0x12000, scoped, tag = 'internal scratch']
  %s0 = inlined_call_operand.vmem [shape: f32[1,2,4096], index: 0, kind: input, shape index: {}, may-alias: {0,3}]
  %s1 = inlined_call_operand.vmem [shape: f32[1,1,4096], index: 1, kind: input, shape index: {}]
  %s2 = inlined_call_operand.vmem [shape: f32[1,1,4096], index: 2, kind: input, shape index: {}]
  %s3 = inlined_call_operand.vmem [shape: f32[1,2,4096], index: 3, kind: output, shape index: {}, may-alias: {0,3}]
  %s4 = sld [smem:[#allocation0]]
  $region22: #{triplet_forward.3} parent=0
    _
  %s6 = ssub.s32 1, %s4
  %s7 = scalar_select 0, %s6, %s4
  // Predicated region
  $region2: #{triplet_forward.3} parent=0 // pred_check
    _
  $region3: #{triplet_forward.3} parent=0 // pred_check_branch
    %9 = sbr.rel (0) target = $region5
  $region4: #{triplet_forward.3} parent=0 // pred_region
    _
  $region5: #{triplet_forward.3} parent=0 // pred_fallthru
    _
  // Predicated region
  $region6: #{triplet_forward.3} parent=0 // pred_check
    _
  $region7: #{triplet_forward.3} parent=0 // pred_check_branch
    %11 = sbr.rel (0) target = $region9
  $region8: #{triplet_forward.3} parent=0 // pred_region
    _
  $region9: #{triplet_forward.3} parent=0 // pred_fallthru
    _
  // Predicated region
  $region10: #{triplet_forward.3} parent=0 // pred_check
    _
  $region11: #{triplet_forward.3} parent=0 // pred_check_branch
    %13 = sbr.rel (0) target = $region13
  $region12: #{triplet_forward.3} parent=0 // pred_region
    _
  $region13: #{triplet_forward.3} parent=0 // pred_fallthru
    _
  %v14 = vld [vmem:[%s0] sm:$0xff]
  %v15 = vld [vmem:[%s0 + $0x8] sm:$0xff]
  %v16 = vld [vmem:[%s0 + $0x10] sm:$0xff]
  %v17 = vld [vmem:[%s0 + $0x18] sm:$0xff]
  %v18 = vld [vmem:[%s0 + $0x20] sm:$0xff]
  %v19 = vld [vmem:[%s0 + $0x28] sm:$0xff]
  %v20 = vld [vmem:[%s0 + $0x30] sm:$0xff]
  %v21 = vld [vmem:[%s0 + $0x38] sm:$0xff]
  %v22 = vld [vmem:[%s1] sm:$0xff]
  %v23 = vld [vmem:[%s1 + $0x8] sm:$0xff]
  %v24 = vld [vmem:[%s1 + $0x10] sm:$0xff]
  %v25 = vld [vmem:[%s1 + $0x18] sm:$0xff]
  %v30 = vlaneseq
  %v31 = vshrl.u32 %v30, 7
  %v32 = vsub.s32 0, %v31
  %v33 = vrot.slane %v22, %v32
  %v34 = vlaneseq
  %v35 = vshrl.u32 %v34, 7
  %v36 = vsub.s32 1, %v35
  %v37 = vrot.slane %v22, %v36
  %v38 = vlaneseq
  %v39 = vshrl.u32 %v38, 7
  %v40 = vsub.s32 2, %v39
  %v41 = vrot.slane %v22, %v40
  %v42 = vlaneseq
  %v43 = vshrl.u32 %v42, 7
  %v44 = vsub.s32 3, %v43
  %v45 = vrot.slane %v22, %v44
  %v46 = vlaneseq
  %v47 = vshrl.u32 %v46, 7
  %v48 = vsub.s32 4, %v47
  %v49 = vrot.slane %v22, %v48
  %v50 = vlaneseq
  %v51 = vshrl.u32 %v50, 7
  %v52 = vsub.s32 5, %v51
  %v53 = vrot.slane %v22, %v52
  %v54 = vlaneseq
  %v55 = vshrl.u32 %v54, 7
  %v56 = vsub.s32 6, %v55
  %v57 = vrot.slane %v22, %v56
  %v58 = vlaneseq
  %v59 = vshrl.u32 %v58, 7
  %v60 = vsub.s32 7, %v59
  %v61 = vrot.slane %v22, %v60
  %v62 = vlaneseq
  %v63 = vshrl.u32 %v62, 7
  %v64 = vsub.s32 0, %v63
  %v65 = vrot.slane %v23, %v64
  %v66 = vlaneseq
  %v67 = vshrl.u32 %v66, 7
  %v68 = vsub.s32 1, %v67
  %v69 = vrot.slane %v23, %v68
  %v70 = vlaneseq
  %v71 = vshrl.u32 %v70, 7
  %v72 = vsub.s32 2, %v71
  %v73 = vrot.slane %v23, %v72
  %v74 = vlaneseq
  %v75 = vshrl.u32 %v74, 7
  %v76 = vsub.s32 3, %v75
  %v77 = vrot.slane %v23, %v76
  %v78 = vlaneseq
  %v79 = vshrl.u32 %v78, 7
  %v80 = vsub.s32 4, %v79
  %v81 = vrot.slane %v23, %v80
  %v82 = vlaneseq
  %v83 = vshrl.u32 %v82, 7
  %v84 = vsub.s32 5, %v83
  %v85 = vrot.slane %v23, %v84
  %v86 = vlaneseq
  %v87 = vshrl.u32 %v86, 7
  %v88 = vsub.s32 6, %v87
  %v89 = vrot.slane %v23, %v88
  %v90 = vlaneseq
  %v91 = vshrl.u32 %v90, 7
  %v92 = vsub.s32 7, %v91
  %v93 = vrot.slane %v23, %v92
  %v94 = vlaneseq
  %v95 = vshrl.u32 %v94, 7
  %v96 = vsub.s32 0, %v95
  %v97 = vrot.slane %v24, %v96
  %v98 = vlaneseq
  %v99 = vshrl.u32 %v98, 7
  %v100 = vsub.s32 1, %v99
  %v101 = vrot.slane %v24, %v100
  %v102 = vlaneseq
  %v103 = vshrl.u32 %v102, 7
  %v104 = vsub.s32 2, %v103
  %v105 = vrot.slane %v24, %v104
  %v106 = vlaneseq
  %v107 = vshrl.u32 %v106, 7
  %v108 = vsub.s32 3, %v107
  %v109 = vrot.slane %v24, %v108
  %v110 = vlaneseq
  %v111 = vshrl.u32 %v110, 7
  %v112 = vsub.s32 4, %v111
  %v113 = vrot.slane %v24, %v112
  %v114 = vlaneseq
  %v115 = vshrl.u32 %v114, 7
  %v116 = vsub.s32 5, %v115
  %v117 = vrot.slane %v24, %v116
  %v118 = vlaneseq
  %v119 = vshrl.u32 %v118, 7
  %v120 = vsub.s32 6, %v119
  %v121 = vrot.slane %v24, %v120
  %v122 = vlaneseq
  %v123 = vshrl.u32 %v122, 7
  %v124 = vsub.s32 7, %v123
  %v125 = vrot.slane %v24, %v124
  %v126 = vlaneseq
  %v127 = vshrl.u32 %v126, 7
  %v128 = vsub.s32 0, %v127
  %v129 = vrot.slane %v25, %v128
  %v130 = vlaneseq
  %v131 = vshrl.u32 %v130, 7
  %v132 = vsub.s32 1, %v131
  %v133 = vrot.slane %v25, %v132
  %v134 = vlaneseq
  %v135 = vshrl.u32 %v134, 7
  %v136 = vsub.s32 2, %v135
  %v137 = vrot.slane %v25, %v136
  %v138 = vlaneseq
  %v139 = vshrl.u32 %v138, 7
  %v140 = vsub.s32 3, %v139
  %v141 = vrot.slane %v25, %v140
  %v142 = vlaneseq
  %v143 = vshrl.u32 %v142, 7
  %v144 = vsub.s32 4, %v143
  %v145 = vrot.slane %v25, %v144
  %v146 = vlaneseq
  %v147 = vshrl.u32 %v146, 7
  %v148 = vsub.s32 5, %v147
  %v149 = vrot.slane %v25, %v148
  %v150 = vlaneseq
  %v151 = vshrl.u32 %v150, 7
  %v152 = vsub.s32 6, %v151
  %v153 = vrot.slane %v25, %v152
  %v154 = vlaneseq
  %v155 = vshrl.u32 %v154, 7
  %v156 = vsub.s32 7, %v155
  %v157 = vrot.slane %v25, %v156
  %v158 = vcombine.low %v33, %v37
  %v159 = vcombine.low %v41, %v45
  %v161 = vunpack.c.l.s4 1983009808
  %v162 = vunpack.c.0.s8 %v161
  %v163 = vlaneseq
  %v164 = vshrl.u32 %v163, 7
  %v165 = vsub.s32 %v162, %v164
  %v166 = vrot.slane %v158, %v165
  %v168 = vunpack.c.l.s4 1983009808
  %v169 = vunpack.c.0.s8 %v168
  %v170 = vlaneseq
  %v171 = vshrl.u32 %v170, 7
  %v172 = vsub.s32 %v169, %v171
  %v173 = vrot.slane %v159, %v172
  %v174 = vcombine.low %v166, %v173
  %v175 = vcombine.low %v49, %v53
  %v176 = vcombine.low %v57, %v61
  %v178 = vunpack.c.l.s4 1983009808
  %v179 = vunpack.c.0.s8 %v178
  %v180 = vlaneseq
  %v181 = vshrl.u32 %v180, 7
  %v182 = vsub.s32 %v179, %v181
  %v183 = vrot.slane %v175, %v182
  %v185 = vunpack.c.l.s4 1983009808
  %v186 = vunpack.c.0.s8 %v185
  %v187 = vlaneseq
  %v188 = vshrl.u32 %v187, 7
  %v189 = vsub.s32 %v186, %v188
  %v190 = vrot.slane %v176, %v189
  %v191 = vcombine.low %v183, %v190
  %v192 = vcombine.low %v65, %v69
  %v193 = vcombine.low %v73, %v77
  %v195 = vunpack.c.l.s4 1983009808
  %v196 = vunpack.c.0.s8 %v195
  %v197 = vlaneseq
  %v198 = vshrl.u32 %v197, 7
  %v199 = vsub.s32 %v196, %v198
  %v200 = vrot.slane %v192, %v199
  %v202 = vunpack.c.l.s4 1983009808
  %v203 = vunpack.c.0.s8 %v202
  %v204 = vlaneseq
  %v205 = vshrl.u32 %v204, 7
  %v206 = vsub.s32 %v203, %v205
  %v207 = vrot.slane %v193, %v206
  %v208 = vcombine.low %v200, %v207
  %v209 = vcombine.low %v81, %v85
  %v210 = vcombine.low %v89, %v93
  %v212 = vunpack.c.l.s4 1983009808
  %v213 = vunpack.c.0.s8 %v212
  %v214 = vlaneseq
  %v215 = vshrl.u32 %v214, 7
  %v216 = vsub.s32 %v213, %v215
  %v217 = vrot.slane %v209, %v216
  %v219 = vunpack.c.l.s4 1983009808
  %v220 = vunpack.c.0.s8 %v219
  %v221 = vlaneseq
  %v222 = vshrl.u32 %v221, 7
  %v223 = vsub.s32 %v220, %v222
  %v224 = vrot.slane %v210, %v223
  %v225 = vcombine.low %v217, %v224
  %v226 = vcombine.low %v97, %v101
  %v227 = vcombine.low %v105, %v109
  %v229 = vunpack.c.l.s4 1983009808
  %v230 = vunpack.c.0.s8 %v229
  %v231 = vlaneseq
  %v232 = vshrl.u32 %v231, 7
  %v233 = vsub.s32 %v230, %v232
  %v234 = vrot.slane %v226, %v233
  %v236 = vunpack.c.l.s4 1983009808
  %v237 = vunpack.c.0.s8 %v236
  %v238 = vlaneseq
  %v239 = vshrl.u32 %v238, 7
  %v240 = vsub.s32 %v237, %v239
  %v241 = vrot.slane %v227, %v240
  %v242 = vcombine.low %v234, %v241
  %v243 = vcombine.low %v113, %v117
  %v244 = vcombine.low %v121, %v125
  %v246 = vunpack.c.l.s4 1983009808
  %v247 = vunpack.c.0.s8 %v246
  %v248 = vlaneseq
  %v249 = vshrl.u32 %v248, 7
  %v250 = vsub.s32 %v247, %v249
  %v251 = vrot.slane %v243, %v250
  %v253 = vunpack.c.l.s4 1983009808
  %v254 = vunpack.c.0.s8 %v253
  %v255 = vlaneseq
  %v256 = vshrl.u32 %v255, 7
  %v257 = vsub.s32 %v254, %v256
  %v258 = vrot.slane %v244, %v257
  %v259 = vcombine.low %v251, %v258
  %v260 = vcombine.low %v129, %v133
  %v261 = vcombine.low %v137, %v141
  %v263 = vunpack.c.l.s4 1983009808
  %v264 = vunpack.c.0.s8 %v263
  %v265 = vlaneseq
  %v266 = vshrl.u32 %v265, 7
  %v267 = vsub.s32 %v264, %v266
  %v268 = vrot.slane %v260, %v267
  %v270 = vunpack.c.l.s4 1983009808
  %v271 = vunpack.c.0.s8 %v270
  %v272 = vlaneseq
  %v273 = vshrl.u32 %v272, 7
  %v274 = vsub.s32 %v271, %v273
  %v275 = vrot.slane %v261, %v274
  %v276 = vcombine.low %v268, %v275
  %v277 = vcombine.low %v145, %v149
  %v278 = vcombine.low %v153, %v157
  %v280 = vunpack.c.l.s4 1983009808
  %v281 = vunpack.c.0.s8 %v280
  %v282 = vlaneseq
  %v283 = vshrl.u32 %v282, 7
  %v284 = vsub.s32 %v281, %v283
  %v285 = vrot.slane %v277, %v284
  %v287 = vunpack.c.l.s4 1983009808
  %v288 = vunpack.c.0.s8 %v287
  %v289 = vlaneseq
  %v290 = vshrl.u32 %v289, 7
  %v291 = vsub.s32 %v288, %v290
  %v292 = vrot.slane %v278, %v291
  %v293 = vcombine.low %v285, %v292
  %v302 = vmul.f32 %v14, %v174
  %v303 = vmul.f32 %v15, %v191
  %v304 = vmul.f32 %v16, %v208
  %v305 = vmul.f32 %v17, %v225
  %v306 = vmul.f32 %v18, %v242
  %v307 = vmul.f32 %v19, %v259
  %v308 = vmul.f32 %v20, %v276
  %v309 = vmul.f32 %v21, %v293
  %v310 = vld [vmem:[%s2] sm:$0xff]
  %v311 = vld [vmem:[%s2 + $0x8] sm:$0xff]
  %v312 = vld [vmem:[%s2 + $0x10] sm:$0xff]
  %v313 = vld [vmem:[%s2 + $0x18] sm:$0xff]
  %v318 = vlaneseq
  %v319 = vshrl.u32 %v318, 7
  %v320 = vsub.s32 0, %v319
  %v321 = vrot.slane %v310, %v320
  %v322 = vlaneseq
  %v323 = vshrl.u32 %v322, 7
  %v324 = vsub.s32 1, %v323
  %v325 = vrot.slane %v310, %v324
  %v326 = vlaneseq
  %v327 = vshrl.u32 %v326, 7
  %v328 = vsub.s32 2, %v327
  %v329 = vrot.slane %v310, %v328
  %v330 = vlaneseq
  %v331 = vshrl.u32 %v330, 7
  %v332 = vsub.s32 3, %v331
  %v333 = vrot.slane %v310, %v332
  %v334 = vlaneseq
  %v335 = vshrl.u32 %v334, 7
  %v336 = vsub.s32 4, %v335
  %v337 = vrot.slane %v310, %v336
  %v338 = vlaneseq
  %v339 = vshrl.u32 %v338, 7
  %v340 = vsub.s32 5, %v339
  %v341 = vrot.slane %v310, %v340
  %v342 = vlaneseq
  %v343 = vshrl.u32 %v342, 7
  %v344 = vsub.s32 6, %v343
  %v345 = vrot.slane %v310, %v344
  %v346 = vlaneseq
  %v347 = vshrl.u32 %v346, 7
  %v348 = vsub.s32 7, %v347
  %v349 = vrot.slane %v310, %v348
  %v350 = vlaneseq
  %v351 = vshrl.u32 %v350, 7
  %v352 = vsub.s32 0, %v351
  %v353 = vrot.slane %v311, %v352
  %v354 = vlaneseq
  %v355 = vshrl.u32 %v354, 7
  %v356 = vsub.s32 1, %v355
  %v357 = vrot.slane %v311, %v356
  %v358 = vlaneseq
  %v359 = vshrl.u32 %v358, 7
  %v360 = vsub.s32 2, %v359
  %v361 = vrot.slane %v311, %v360
  %v362 = vlaneseq
  %v363 = vshrl.u32 %v362, 7
  %v364 = vsub.s32 3, %v363
  %v365 = vrot.slane %v311, %v364
  %v366 = vlaneseq
  %v367 = vshrl.u32 %v366, 7
  %v368 = vsub.s32 4, %v367
  %v369 = vrot.slane %v311, %v368
  %v370 = vlaneseq
  %v371 = vshrl.u32 %v370, 7
  %v372 = vsub.s32 5, %v371
  %v373 = vrot.slane %v311, %v372
  %v374 = vlaneseq
  %v375 = vshrl.u32 %v374, 7
  %v376 = vsub.s32 6, %v375
  %v377 = vrot.slane %v311, %v376
  %v378 = vlaneseq
  %v379 = vshrl.u32 %v378, 7
  %v380 = vsub.s32 7, %v379
  %v381 = vrot.slane %v311, %v380
  %v382 = vlaneseq
  %v383 = vshrl.u32 %v382, 7
  %v384 = vsub.s32 0, %v383
  %v385 = vrot.slane %v312, %v384
  %v386 = vlaneseq
  %v387 = vshrl.u32 %v386, 7
  %v388 = vsub.s32 1, %v387
  %v389 = vrot.slane %v312, %v388
  %v390 = vlaneseq
  %v391 = vshrl.u32 %v390, 7
  %v392 = vsub.s32 2, %v391
  %v393 = vrot.slane %v312, %v392
  %v394 = vlaneseq
  %v395 = vshrl.u32 %v394, 7
  %v396 = vsub.s32 3, %v395
  %v397 = vrot.slane %v312, %v396
  %v398 = vlaneseq
  %v399 = vshrl.u32 %v398, 7
  %v400 = vsub.s32 4, %v399
  %v401 = vrot.slane %v312, %v400
  %v402 = vlaneseq
  %v403 = vshrl.u32 %v402, 7
  %v404 = vsub.s32 5, %v403
  %v405 = vrot.slane %v312, %v404
  %v406 = vlaneseq
  %v407 = vshrl.u32 %v406, 7
  %v408 = vsub.s32 6, %v407
  %v409 = vrot.slane %v312, %v408
  %v410 = vlaneseq
  %v411 = vshrl.u32 %v410, 7
  %v412 = vsub.s32 7, %v411
  %v413 = vrot.slane %v312, %v412
  %v414 = vlaneseq
  %v415 = vshrl.u32 %v414, 7
  %v416 = vsub.s32 0, %v415
  %v417 = vrot.slane %v313, %v416
  %v418 = vlaneseq
  %v419 = vshrl.u32 %v418, 7
  %v420 = vsub.s32 1, %v419
  %v421 = vrot.slane %v313, %v420
  %v422 = vlaneseq
  %v423 = vshrl.u32 %v422, 7
  %v424 = vsub.s32 2, %v423
  %v425 = vrot.slane %v313, %v424
  %v426 = vlaneseq
  %v427 = vshrl.u32 %v426, 7
  %v428 = vsub.s32 3, %v427
  %v429 = vrot.slane %v313, %v428
  %v430 = vlaneseq
  %v431 = vshrl.u32 %v430, 7
  %v432 = vsub.s32 4, %v431
  %v433 = vrot.slane %v313, %v432
  %v434 = vlaneseq
  %v435 = vshrl.u32 %v434, 7
  %v436 = vsub.s32 5, %v435
  %v437 = vrot.slane %v313, %v436
  %v438 = vlaneseq
  %v439 = vshrl.u32 %v438, 7
  %v440 = vsub.s32 6, %v439
  %v441 = vrot.slane %v313, %v440
  %v442 = vlaneseq
  %v443 = vshrl.u32 %v442, 7
  %v444 = vsub.s32 7, %v443
  %v445 = vrot.slane %v313, %v444
  %v446 = vcombine.low %v321, %v325
  %v447 = vcombine.low %v329, %v333
  %v449 = vunpack.c.l.s4 1983009808
  %v450 = vunpack.c.0.s8 %v449
  %v451 = vlaneseq
  %v452 = vshrl.u32 %v451, 7
  %v453 = vsub.s32 %v450, %v452
  %v454 = vrot.slane %v446, %v453
  %v456 = vunpack.c.l.s4 1983009808
  %v457 = vunpack.c.0.s8 %v456
  %v458 = vlaneseq
  %v459 = vshrl.u32 %v458, 7
  %v460 = vsub.s32 %v457, %v459
  %v461 = vrot.slane %v447, %v460
  %v462 = vcombine.low %v454, %v461
  %v463 = vcombine.low %v337, %v341
  %v464 = vcombine.low %v345, %v349
  %v466 = vunpack.c.l.s4 1983009808
  %v467 = vunpack.c.0.s8 %v466
  %v468 = vlaneseq
  %v469 = vshrl.u32 %v468, 7
  %v470 = vsub.s32 %v467, %v469
  %v471 = vrot.slane %v463, %v470
  %v473 = vunpack.c.l.s4 1983009808
  %v474 = vunpack.c.0.s8 %v473
  %v475 = vlaneseq
  %v476 = vshrl.u32 %v475, 7
  %v477 = vsub.s32 %v474, %v476
  %v478 = vrot.slane %v464, %v477
  %v479 = vcombine.low %v471, %v478
  %v480 = vcombine.low %v353, %v357
  %v481 = vcombine.low %v361, %v365
  %v483 = vunpack.c.l.s4 1983009808
  %v484 = vunpack.c.0.s8 %v483
  %v485 = vlaneseq
  %v486 = vshrl.u32 %v485, 7
  %v487 = vsub.s32 %v484, %v486
  %v488 = vrot.slane %v480, %v487
  %v490 = vunpack.c.l.s4 1983009808
  %v491 = vunpack.c.0.s8 %v490
  %v492 = vlaneseq
  %v493 = vshrl.u32 %v492, 7
  %v494 = vsub.s32 %v491, %v493
  %v495 = vrot.slane %v481, %v494
  %v496 = vcombine.low %v488, %v495
  %v497 = vcombine.low %v369, %v373
  %v498 = vcombine.low %v377, %v381
  %v500 = vunpack.c.l.s4 1983009808
  %v501 = vunpack.c.0.s8 %v500
  %v502 = vlaneseq
  %v503 = vshrl.u32 %v502, 7
  %v504 = vsub.s32 %v501, %v503
  %v505 = vrot.slane %v497, %v504
  %v507 = vunpack.c.l.s4 1983009808
  %v508 = vunpack.c.0.s8 %v507
  %v509 = vlaneseq
  %v510 = vshrl.u32 %v509, 7
  %v511 = vsub.s32 %v508, %v510
  %v512 = vrot.slane %v498, %v511
  %v513 = vcombine.low %v505, %v512
  %v514 = vcombine.low %v385, %v389
  %v515 = vcombine.low %v393, %v397
  %v517 = vunpack.c.l.s4 1983009808
  %v518 = vunpack.c.0.s8 %v517
  %v519 = vlaneseq
  %v520 = vshrl.u32 %v519, 7
  %v521 = vsub.s32 %v518, %v520
  %v522 = vrot.slane %v514, %v521
  %v524 = vunpack.c.l.s4 1983009808
  %v525 = vunpack.c.0.s8 %v524
  %v526 = vlaneseq
  %v527 = vshrl.u32 %v526, 7
  %v528 = vsub.s32 %v525, %v527
  %v529 = vrot.slane %v515, %v528
  %v530 = vcombine.low %v522, %v529
  %v531 = vcombine.low %v401, %v405
  %v532 = vcombine.low %v409, %v413
  %v534 = vunpack.c.l.s4 1983009808
  %v535 = vunpack.c.0.s8 %v534
  %v536 = vlaneseq
  %v537 = vshrl.u32 %v536, 7
  %v538 = vsub.s32 %v535, %v537
  %v539 = vrot.slane %v531, %v538
  %v541 = vunpack.c.l.s4 1983009808
  %v542 = vunpack.c.0.s8 %v541
  %v543 = vlaneseq
  %v544 = vshrl.u32 %v543, 7
  %v545 = vsub.s32 %v542, %v544
  %v546 = vrot.slane %v532, %v545
  %v547 = vcombine.low %v539, %v546
  %v548 = vcombine.low %v417, %v421
  %v549 = vcombine.low %v425, %v429
  %v551 = vunpack.c.l.s4 1983009808
  %v552 = vunpack.c.0.s8 %v551
  %v553 = vlaneseq
  %v554 = vshrl.u32 %v553, 7
  %v555 = vsub.s32 %v552, %v554
  %v556 = vrot.slane %v548, %v555
  %v558 = vunpack.c.l.s4 1983009808
  %v559 = vunpack.c.0.s8 %v558
  %v560 = vlaneseq
  %v561 = vshrl.u32 %v560, 7
  %v562 = vsub.s32 %v559, %v561
  %v563 = vrot.slane %v549, %v562
  %v564 = vcombine.low %v556, %v563
  %v565 = vcombine.low %v433, %v437
  %v566 = vcombine.low %v441, %v445
  %v568 = vunpack.c.l.s4 1983009808
  %v569 = vunpack.c.0.s8 %v568
  %v570 = vlaneseq
  %v571 = vshrl.u32 %v570, 7
  %v572 = vsub.s32 %v569, %v571
  %v573 = vrot.slane %v565, %v572
  %v575 = vunpack.c.l.s4 1983009808
  %v576 = vunpack.c.0.s8 %v575
  %v577 = vlaneseq
  %v578 = vshrl.u32 %v577, 7
  %v579 = vsub.s32 %v576, %v578
  %v580 = vrot.slane %v566, %v579
  %v581 = vcombine.low %v573, %v580
  %v590 = vadd.f32 %v302, %v462
  %v591 = vadd.f32 %v303, %v479
  %v592 = vadd.f32 %v304, %v496
  %v593 = vadd.f32 %v305, %v513
  %v594 = vadd.f32 %v306, %v530
  %v595 = vadd.f32 %v307, %v547
  %v596 = vadd.f32 %v308, %v564
  %v597 = vadd.f32 %v309, %v581
  %598 = vst [vmem:[%s3] sm:$0xff] %v590
  %599 = vst [vmem:[%s3 + $0x8] sm:$0xff] %v591
  %600 = vst [vmem:[%s3 + $0x10] sm:$0xff] %v592
  %601 = vst [vmem:[%s3 + $0x18] sm:$0xff] %v593
  %602 = vst [vmem:[%s3 + $0x20] sm:$0xff] %v594
  %603 = vst [vmem:[%s3 + $0x28] sm:$0xff] %v595
  %604 = vst [vmem:[%s3 + $0x30] sm:$0xff] %v596
  %605 = vst [vmem:[%s3 + $0x38] sm:$0xff] %v597
  // Predicated region
  $region14: #{triplet_forward.3} parent=0 // pred_check
    _
  $region15: #{triplet_forward.3} parent=0 // pred_check_branch
    %607 = sbr.rel (0) target = $region17
  $region16: #{triplet_forward.3} parent=0 // pred_region
    _
  $region17: #{triplet_forward.3} parent=0 // pred_fallthru
    _
  // Predicated region
  $region18: #{triplet_forward.3} parent=0 // pred_check
    _
  $region19: #{triplet_forward.3} parent=0 // pred_check_branch
    %609 = sbr.rel (0) target = $region21
  $region20: #{triplet_forward.3} parent=0 // pred_region
    _
  $region21: #{triplet_forward.3} parent=0 // pred_fallthru
    _

// kernel: triplet_forward.2
$region0: #{triplet_forward.2}
  #allocation0 [shape = 'u32[]', space=smem, size = 0x4, offset = 0x4, fixed_abs, tag = 'smem constant byte address 0x4 - core index']
  #allocation1 [shape = 'u32[144,128]{1,0:T(1,128)}', space=vmem, size = 0x12000, scoped, tag = 'internal scratch']
  %s0 = inlined_call_operand.vmem [shape: f32[2,8,256], index: 0, kind: input, shape index: {}]
  %s1 = inlined_call_operand.vmem [shape: f32[2,8,256], index: 1, kind: input, shape index: {}]
  %s2 = inlined_call_operand.vmem [shape: f32[2], index: 2, kind: input, shape index: {}]
  %s3 = inlined_call_operand.vmem [shape: f32[9,1,256], index: 3, kind: input, shape index: {}]
  %s4 = inlined_call_operand.vmem [shape: f32[16,72], index: 4, kind: input, shape index: {}]
  %s5 = inlined_call_operand.vmem [shape: f32[2,16,256], index: 5, kind: output, shape index: {0}]
  %s6 = inlined_call_operand.vmem [shape: f32[1,16,2], index: 6, kind: output, shape index: {1}]
  %7 = xla_tuple %s5, %s6
  %s8 = sld [smem:[#allocation0]]
  $region42: #{triplet_forward.2} parent=0
    _
  %s10 = ssub.s32 1, %s8
  %s11 = scalar_select 0, %s10, %s8
  $region1: #{triplet_forward.2} parent=0
    #allocation2 [shape = 'u8[512]{0}', space=smem, size = 0x200, scoped, tag = 'input window, operand 2, single buffered']
    #allocation3 [shape = 's32[1]{0}', space=sflag, size = 0x4, scoped, tag = 'scoped memory for triplet_forward.2']
    %12 = vsyncpa [#allocation3], 0
    // Predicated region
    $region2: #{triplet_forward.2} parent=1 // pred_check
      _
    $region3: #{triplet_forward.2} parent=1 // pred_check_branch
      %14 = sbr.rel (0) target = $region5
    $region4: #{triplet_forward.2} parent=1 // pred_region
      _
    $region5: #{triplet_forward.2} parent=1 // pred_fallthru
      _
    // Predicated region
    $region6: #{triplet_forward.2} parent=1 // pred_check
      _
    $region7: #{triplet_forward.2} parent=1 // pred_check_branch
      %16 = sbr.rel (0) target = $region9
    $region8: #{triplet_forward.2} parent=1 // pred_region
      _
    $region9: #{triplet_forward.2} parent=1 // pred_fallthru
      _
    // Predicated region
    $region10: #{triplet_forward.2} parent=1 // pred_check
      _
    $region11: #{triplet_forward.2} parent=1 // pred_check_branch
      %18 = sbr.rel (0) target = $region13
    $region12: #{triplet_forward.2} parent=1 // pred_region
      %s20 = ssub.s32 16, 16
      %21 = vsyncadd [#allocation3], %s20
      %s23 = sshll.u32 %s2, 4
      %s24 = int_to_ptr.vmem [resolvable:$true] %s23
      %26 = dma.vmem_to_smem %s24, 16, [#allocation2], [#allocation3]
    $region13: #{triplet_forward.2} parent=1 // pred_fallthru
      _
    // Predicated region
    $region14: #{triplet_forward.2} parent=1 // pred_check
      _
    $region15: #{triplet_forward.2} parent=1 // pred_check_branch
      %28 = sbr.rel (0) target = $region17
    $region16: #{triplet_forward.2} parent=1 // pred_region
      _
    $region17: #{triplet_forward.2} parent=1 // pred_fallthru
      _
    // Predicated region
    $region18: #{triplet_forward.2} parent=1 // pred_check
      _
    $region19: #{triplet_forward.2} parent=1 // pred_check_branch
      %30 = sbr.rel (0) target = $region21
    $region20: #{triplet_forward.2} parent=1 // pred_region
      _
    $region21: #{triplet_forward.2} parent=1 // pred_fallthru
      _
    // Predicated region
    $region22: #{triplet_forward.2} parent=1 // pred_check
      _
    $region23: #{triplet_forward.2} parent=1 // pred_check_branch
      %32 = sbr.rel (0) target = $region25
    $region24: #{triplet_forward.2} parent=1 // pred_region
      %33 = dma.done [#allocation3], 16
    $region25: #{triplet_forward.2} parent=1 // pred_fallthru
      _
    %34 = sfence
    %v35 = vld [vmem:[%s0] sm:$0xff]
    %v36 = vld [vmem:[%s0 + $0x8] sm:$0xff]
    %s37 = sld [smem:[#allocation2]]
    %v38 = vstv %s37
    %v39 = vmul.f32 %v35, %v38
    %v40 = vmul.f32 %v36, %v38
    %v41 = vld [vmem:[%s1] sm:$0xff]
    %v42 = vld [vmem:[%s1 + $0x8] sm:$0xff]
    %s43 = sld [smem:[#allocation2 + $0x1]]
    %v44 = vstv %s43
    %v45 = vmul.f32 %v41, %v44
    %v46 = vmul.f32 %v42, %v44
    %v47 = vadd.f32 %v39, %v45
    %v48 = vadd.f32 %v40, %v46
    %v49 = vmax.f32 %v47, 0.0
    %v50 = vmax.f32 %v48, 0.0
    %51 = vrot.lane.b32.xlu0 %v49, 17
    %v52 = vpop.permute.xlu0 %51
    %53 = vrot.lane.b32.xlu0 %v50, 17
    %v54 = vpop.permute.xlu0 %53
    %v55 = vlaneseq
    %v56 = vand.u32 %v55, 127
    %vm57 = vcmp.lt.s32.totalorder %v56, 17
    %v58 = vsel %vm57, %v52, %v54
    %v59 = vsel %vm57, %v54, %v52
    %v60 = vld [vmem:[%s3] sm:$0x3]
    %v62 = vlaneseq
    %v63 = vshrl.u32 %v62, 7
    %v64 = vsub.s32 0, %v63
    %v65 = vrot.slane %v60, %v64
    %v66 = vlaneseq
    %v67 = vshrl.u32 %v66, 7
    %v68 = vsub.s32 1, %v67
    %v69 = vrot.slane %v60, %v68
    %v72 = vmul.f32 %v59, %v65
    %v73 = vmul.f32 %v58, %v69
    %74 = vrot.lane.b32.xlu0 %v49, 16
    %v75 = vpop.permute.xlu0 %74
    %76 = vrot.lane.b32.xlu0 %v50, 16
    %v77 = vpop.permute.xlu0 %76
    %vm78 = vcmp.lt.s32.totalorder %v56, 16
    %v79 = vsel %vm78, %v75, %v77
    %v80 = vsel %vm78, %v77, %v75
    %s81 = scalar_lea.vmem %s3, 2
    %v82 = vld [vmem:[%s81] sm:$0x3]
    %v84 = vlaneseq
    %v85 = vshrl.u32 %v84, 7
    %v86 = vsub.s32 0, %v85
    %v87 = vrot.slane %v82, %v86
    %v88 = vlaneseq
    %v89 = vshrl.u32 %v88, 7
    %v90 = vsub.s32 1, %v89
    %v91 = vrot.slane %v82, %v90
    %v94 = vmul.f32 %v80, %v87
    %v95 = vmul.f32 %v79, %v91
    %96 = vrot.lane.b32.xlu0 %v49, 15
    %v97 = vpop.permute.xlu0 %96
    %98 = vrot.lane.b32.xlu0 %v50, 15
    %v99 = vpop.permute.xlu0 %98
    %vm100 = vcmp.lt.s32.totalorder %v56, 15
    %v101 = vsel %vm100, %v97, %v99
    %v102 = vsel %vm100, %v99, %v97
    %s103 = scalar_lea.vmem %s3, 4
    %v104 = vld [vmem:[%s103] sm:$0x3]
    %v106 = vlaneseq
    %v107 = vshrl.u32 %v106, 7
    %v108 = vsub.s32 0, %v107
    %v109 = vrot.slane %v104, %v108
    %v110 = vlaneseq
    %v111 = vshrl.u32 %v110, 7
    %v112 = vsub.s32 1, %v111
    %v113 = vrot.slane %v104, %v112
    %v116 = vmul.f32 %v102, %v109
    %v117 = vmul.f32 %v101, %v113
    %118 = vrot.lane.b32.xlu0 %v49, 1
    %v119 = vpop.permute.xlu0 %118
    %120 = vrot.lane.b32.xlu0 %v50, 1
    %v121 = vpop.permute.xlu0 %120
    %vm122 = vcmp.lt.s32.totalorder %v56, 1
    %v123 = vsel %vm122, %v119, %v121
    %v124 = vsel %vm122, %v121, %v119
    %s125 = scalar_lea.vmem %s3, 6
    %v126 = vld [vmem:[%s125] sm:$0x3]
    %v128 = vlaneseq
    %v129 = vshrl.u32 %v128, 7
    %v130 = vsub.s32 0, %v129
    %v131 = vrot.slane %v126, %v130
    %v132 = vlaneseq
    %v133 = vshrl.u32 %v132, 7
    %v134 = vsub.s32 1, %v133
    %v135 = vrot.slane %v126, %v134
    %v138 = vmul.f32 %v124, %v131
    %v139 = vmul.f32 %v123, %v135
    %140 = vrot.lane.b32.xlu0 %v49, 127
    %v141 = vpop.permute.xlu0 %140
    %142 = vrot.lane.b32.xlu0 %v50, 127
    %v143 = vpop.permute.xlu0 %142
    %vm144 = vcmp.lt.s32.totalorder %v56, 127
    %v145 = vsel %vm144, %v141, %v143
    %v146 = vsel %vm144, %v143, %v141
    %s147 = scalar_lea.vmem %s3, 10
    %v148 = vld [vmem:[%s147] sm:$0x3]
    %v150 = vlaneseq
    %v151 = vshrl.u32 %v150, 7
    %v152 = vsub.s32 0, %v151
    %v153 = vrot.slane %v148, %v152
    %v154 = vlaneseq
    %v155 = vshrl.u32 %v154, 7
    %v156 = vsub.s32 1, %v155
    %v157 = vrot.slane %v148, %v156
    %v160 = vmul.f32 %v145, %v153
    %v161 = vmul.f32 %v146, %v157
    %162 = vrot.lane.b32.xlu0 %v49, 113
    %v163 = vpop.permute.xlu0 %162
    %164 = vrot.lane.b32.xlu0 %v50, 113
    %v165 = vpop.permute.xlu0 %164
    %vm166 = vcmp.lt.s32.totalorder %v56, 113
    %v167 = vsel %vm166, %v163, %v165
    %v168 = vsel %vm166, %v165, %v163
    %s169 = scalar_lea.vmem %s3, 12
    %v170 = vld [vmem:[%s169] sm:$0x3]
    %v172 = vlaneseq
    %v173 = vshrl.u32 %v172, 7
    %v174 = vsub.s32 0, %v173
    %v175 = vrot.slane %v170, %v174
    %v176 = vlaneseq
    %v177 = vshrl.u32 %v176, 7
    %v178 = vsub.s32 1, %v177
    %v179 = vrot.slane %v170, %v178
    %v182 = vmul.f32 %v167, %v175
    %v183 = vmul.f32 %v168, %v179
    %184 = vrot.lane.b32.xlu0 %v49, 112
    %v185 = vpop.permute.xlu0 %184
    %186 = vrot.lane.b32.xlu0 %v50, 112
    %v187 = vpop.permute.xlu0 %186
    %vm188 = vcmp.lt.s32.totalorder %v56, 112
    %v189 = vsel %vm188, %v185, %v187
    %v190 = vsel %vm188, %v187, %v185
    %s191 = scalar_lea.vmem %s3, 14
    %v192 = vld [vmem:[%s191] sm:$0x3]
    %v194 = vlaneseq
    %v195 = vshrl.u32 %v194, 7
    %v196 = vsub.s32 0, %v195
    %v197 = vrot.slane %v192, %v196
    %v198 = vlaneseq
    %v199 = vshrl.u32 %v198, 7
    %v200 = vsub.s32 1, %v199
    %v201 = vrot.slane %v192, %v200
    %v204 = vmul.f32 %v189, %v197
    %v205 = vmul.f32 %v190, %v201
    %206 = vrot.lane.b32.xlu0 %v49, 111
    %v207 = vpop.permute.xlu0 %206
    %208 = vrot.lane.b32.xlu0 %v50, 111
    %v209 = vpop.permute.xlu0 %208
    %vm210 = vcmp.lt.s32.totalorder %v56, 111
    %v211 = vsel %vm210, %v207, %v209
    %v212 = vsel %vm210, %v209, %v207
    %s213 = scalar_lea.vmem %s3, 16
    %v214 = vld [vmem:[%s213] sm:$0x3]
    %v216 = vlaneseq
    %v217 = vshrl.u32 %v216, 7
    %v218 = vsub.s32 0, %v217
    %v219 = vrot.slane %v214, %v218
    %v220 = vlaneseq
    %v221 = vshrl.u32 %v220, 7
    %v222 = vsub.s32 1, %v221
    %v223 = vrot.slane %v214, %v222
    %v226 = vmul.f32 %v211, %v219
    %v227 = vmul.f32 %v212, %v223
    %v228 = vld [vmem:[%s4] sm:$0xff]
    %v229 = vld [vmem:[%s4 + $0x8] sm:$0xff]
    %vm230 = vcmask 588800
    %v232 = vsel %vm230, %v228, 0
    %v235 = vsel %vm230, %v229, 0
    %237 = vmatprep.subr.mxu0 %v73
    %238 = vmatpush1.msra.mxu0 %v72
    %239 = vmatprep.subr.mxu0 %v95
    %240 = vmatpush1.msra.mxu0 %v94
    %241 = vmatprep.subr.mxu0 %v117
    %242 = vmatpush1.msra.mxu0 %v116
    %243 = vmatprep.subr.mxu0 %v139
    %244 = vmatpush1.msra.mxu0 %v138
    %245 = vmatprep.subr.mxu0 %v50
    %246 = vmatpush1.msra.mxu0 %v49
    %247 = vmatprep.subr.mxu0 %v161
    %248 = vmatpush1.msra.mxu0 %v160
    %249 = vmatprep.subr.mxu0 %v183
    %250 = vmatpush1.msra.mxu0 %v182
    %251 = vmatprep.subr.mxu0 %v205
    %252 = vmatpush1.msra.mxu0 %v204
    %253 = vmatprep.subr.mxu0 %v227
    %254 = vmatpush1.msra.mxu0 %v226
    %255 = vmatprep.subr.mxu0 0.0
    %256 = vmatpush1.msra.mxu0 0.0
    %257 = vmatprep.subr.mxu0 0.0
    %258 = vmatpush1.msra.mxu0 0.0
    %259 = vmatprep.subr.mxu0 0.0
    %260 = vmatpush1.msra.mxu0 0.0
    %261 = vmatprep.subr.mxu0 0.0
    %262 = vmatpush1.msra.mxu0 0.0
    %263 = vmatprep.subr.mxu0 0.0
    %264 = vmatpush1.msra.mxu0 0.0
    %265 = vmatprep.subr.mxu0 0.0
    %266 = vmatpush1.msra.mxu0 0.0
    %267 = vmatprep.subr.mxu0 0.0
    %268 = vmatpush1.msra.mxu0 0.0
    %269 = vmatprep.subr.mxu0 0.0
    %270 = vmatpush1.msra.mxu0 0.0
    %271 = vmatprep.subr.mxu0 0.0
    %272 = vmatpush1.msra.mxu0 0.0
    %273 = vmatprep.subr.mxu0 0.0
    %274 = vmatpush1.msra.mxu0 0.0
    %275 = vmatprep.subr.mxu0 0.0
    %276 = vmatpush1.msra.mxu0 0.0
    %277 = vmatprep.subr.mxu0 0.0
    %278 = vmatpush1.msra.mxu0 0.0
    %279 = vmatprep.subr.mxu0 0.0
    %280 = vmatpush1.msra.mxu0 0.0
    %281 = vmatprep.subr.mxu0 0.0
    %282 = vmatpush1.msra.mxu0 0.0
    %283 = vmatprep.subr.mxu0 0.0
    %284 = vmatpush1.msra.mxu0 0.0
    %285 = vmatprep.subr.mxu0 0.0
    %286 = vmatpush1.msra.mxu0 0.0
    %287 = vmatprep.subr.mxu0 0.0
    %288 = vmatpush1.msra.mxu0 0.0
    %289 = vmatprep.subr.mxu0 0.0
    %290 = vmatpush1.msra.mxu0 0.0
    %291 = vmatprep.subr.mxu0 0.0
    %292 = vmatpush1.msra.mxu0 0.0
    %293 = vmatprep.subr.mxu0 0.0
    %294 = vmatpush1.msra.mxu0 0.0
    %295 = vmatprep.subr.mxu0 0.0
    %296 = vmatpush1.msra.mxu0 0.0
    %297 = vmatprep.subr.mxu0 0.0
    %298 = vmatpush1.msra.mxu0 0.0
    %299 = vmatprep.subr.mxu0 0.0
    %300 = vmatpush1.msra.mxu0 0.0
    %301 = vmatprep.mubr.f32.mxu0 0.0
    %302 = vmatmul.mubr.f32.gmra.mrb[0].mxu0 %v232
    %v303 = vpop.f32.mrb[0].mxu0
    %v304 = vadd.f32 0.0, %v303
    %v305 = vpop.f32.mrb[0].mxu0
    %v306 = vadd.f32 0.0, %v305
    %307 = vmatprep.mubr.f32.mxu0 0.0
    %308 = vmatmul.mubr.f32.gmra.mrb[0].mxu0 %v235
    %v309 = vpop.f32.mrb[0].mxu0
    %v310 = vadd.f32 0.0, %v309
    %v311 = vpop.f32.mrb[0].mxu0
    %v312 = vadd.f32 0.0, %v311
    %313 = vdwg.mxu0
    %314 = vst [vmem:[%s5] sm:$0xff] %v304
    %315 = vst [vmem:[%s5 + $0x8] sm:$0xff] %v306
    %316 = vst [vmem:[%s5 + $0x10] sm:$0xff] %v310
    %317 = vst [vmem:[%s5 + $0x18] sm:$0xff] %v312
    %v318 = vadd.f32 %v304, %v306
    %319 = vadd.xlane.f32.xlu0 %v318
    %v320 = vpop.xlane.xlu0 %319
    %v321 = vadd.f32 %v310, %v312
    %322 = vadd.xlane.f32.xlu0 %v321
    %v323 = vpop.xlane.xlu0 %322
    %v324 = vadd.f32 %v320, 0.0
    %v325 = vadd.f32 %v323, 0.0
    %v326 = vmul.f32 %v304, %v304
    %v327 = vmul.f32 %v306, %v306
    %v328 = vmul.f32 %v310, %v310
    %v329 = vmul.f32 %v312, %v312
    %v330 = vadd.f32 %v326, %v327
    %331 = vadd.xlane.f32.xlu0 %v330
    %v332 = vpop.xlane.xlu0 %331
    %v333 = vadd.f32 %v328, %v329
    %334 = vadd.xlane.f32.xlu0 %v333
    %v335 = vpop.xlane.xlu0 %334
    %v336 = vadd.f32 %v332, 0.0
    %v337 = vadd.f32 %v335, 0.0
    %s338 = scalar_lea.vmem %s0, 16
    %v339 = vld [vmem:[%s338] sm:$0xff]
    %v340 = vld [vmem:[%s338 + $0x8] sm:$0xff]
    %s341 = sld [smem:[#allocation2]]
    %v342 = vstv %s341
    %v343 = vmul.f32 %v339, %v342
    %v344 = vmul.f32 %v340, %v342
    %s345 = scalar_lea.vmem %s1, 16
    %v346 = vld [vmem:[%s345] sm:$0xff]
    %v347 = vld [vmem:[%s345 + $0x8] sm:$0xff]
    %s348 = sld [smem:[#allocation2 + $0x1]]
    %v349 = vstv %s348
    %v350 = vmul.f32 %v346, %v349
    %v351 = vmul.f32 %v347, %v349
    %v352 = vadd.f32 %v343, %v350
    %v353 = vadd.f32 %v344, %v351
    %v354 = vmax.f32 %v352, 0.0
    %v355 = vmax.f32 %v353, 0.0
    %356 = vrot.lane.b32.xlu0 %v354, 17
    %v357 = vpop.permute.xlu0 %356
    %358 = vrot.lane.b32.xlu0 %v355, 17
    %v359 = vpop.permute.xlu0 %358
    %v360 = vsel %vm57, %v357, %v359
    %v361 = vsel %vm57, %v359, %v357
    %v362 = vld [vmem:[%s3] sm:$0x3]
    %v364 = vlaneseq
    %v365 = vshrl.u32 %v364, 7
    %v366 = vsub.s32 0, %v365
    %v367 = vrot.slane %v362, %v366
    %v368 = vlaneseq
    %v369 = vshrl.u32 %v368, 7
    %v370 = vsub.s32 1, %v369
    %v371 = vrot.slane %v362, %v370
    %v374 = vmul.f32 %v361, %v367
    %v375 = vmul.f32 %v360, %v371
    %376 = vrot.lane.b32.xlu0 %v354, 16
    %v377 = vpop.permute.xlu0 %376
    %378 = vrot.lane.b32.xlu0 %v355, 16
    %v379 = vpop.permute.xlu0 %378
    %v380 = vsel %vm78, %v377, %v379
    %v381 = vsel %vm78, %v379, %v377
    %v382 = vld [vmem:[%s81] sm:$0x3]
    %v384 = vlaneseq
    %v385 = vshrl.u32 %v384, 7
    %v386 = vsub.s32 0, %v385
    %v387 = vrot.slane %v382, %v386
    %v388 = vlaneseq
    %v389 = vshrl.u32 %v388, 7
    %v390 = vsub.s32 1, %v389
    %v391 = vrot.slane %v382, %v390
    %v394 = vmul.f32 %v381, %v387
    %v395 = vmul.f32 %v380, %v391
    %396 = vrot.lane.b32.xlu0 %v354, 15
    %v397 = vpop.permute.xlu0 %396
    %398 = vrot.lane.b32.xlu0 %v355, 15
    %v399 = vpop.permute.xlu0 %398
    %v400 = vsel %vm100, %v397, %v399
    %v401 = vsel %vm100, %v399, %v397
    %v402 = vld [vmem:[%s103] sm:$0x3]
    %v404 = vlaneseq
    %v405 = vshrl.u32 %v404, 7
    %v406 = vsub.s32 0, %v405
    %v407 = vrot.slane %v402, %v406
    %v408 = vlaneseq
    %v409 = vshrl.u32 %v408, 7
    %v410 = vsub.s32 1, %v409
    %v411 = vrot.slane %v402, %v410
    %v414 = vmul.f32 %v401, %v407
    %v415 = vmul.f32 %v400, %v411
    %416 = vrot.lane.b32.xlu0 %v354, 1
    %v417 = vpop.permute.xlu0 %416
    %418 = vrot.lane.b32.xlu0 %v355, 1
    %v419 = vpop.permute.xlu0 %418
    %v420 = vsel %vm122, %v417, %v419
    %v421 = vsel %vm122, %v419, %v417
    %v422 = vld [vmem:[%s125] sm:$0x3]
    %v424 = vlaneseq
    %v425 = vshrl.u32 %v424, 7
    %v426 = vsub.s32 0, %v425
    %v427 = vrot.slane %v422, %v426
    %v428 = vlaneseq
    %v429 = vshrl.u32 %v428, 7
    %v430 = vsub.s32 1, %v429
    %v431 = vrot.slane %v422, %v430
    %v434 = vmul.f32 %v421, %v427
    %v435 = vmul.f32 %v420, %v431
    %436 = vrot.lane.b32.xlu0 %v354, 127
    %v437 = vpop.permute.xlu0 %436
    %438 = vrot.lane.b32.xlu0 %v355, 127
    %v439 = vpop.permute.xlu0 %438
    %v440 = vsel %vm144, %v437, %v439
    %v441 = vsel %vm144, %v439, %v437
    %v442 = vld [vmem:[%s147] sm:$0x3]
    %v444 = vlaneseq
    %v445 = vshrl.u32 %v444, 7
    %v446 = vsub.s32 0, %v445
    %v447 = vrot.slane %v442, %v446
    %v448 = vlaneseq
    %v449 = vshrl.u32 %v448, 7
    %v450 = vsub.s32 1, %v449
    %v451 = vrot.slane %v442, %v450
    %v454 = vmul.f32 %v440, %v447
    %v455 = vmul.f32 %v441, %v451
    %456 = vrot.lane.b32.xlu0 %v354, 113
    %v457 = vpop.permute.xlu0 %456
    %458 = vrot.lane.b32.xlu0 %v355, 113
    %v459 = vpop.permute.xlu0 %458
    %v460 = vsel %vm166, %v457, %v459
    %v461 = vsel %vm166, %v459, %v457
    %v462 = vld [vmem:[%s169] sm:$0x3]
    %v464 = vlaneseq
    %v465 = vshrl.u32 %v464, 7
    %v466 = vsub.s32 0, %v465
    %v467 = vrot.slane %v462, %v466
    %v468 = vlaneseq
    %v469 = vshrl.u32 %v468, 7
    %v470 = vsub.s32 1, %v469
    %v471 = vrot.slane %v462, %v470
    %v474 = vmul.f32 %v460, %v467
    %v475 = vmul.f32 %v461, %v471
    %476 = vrot.lane.b32.xlu0 %v354, 112
    %v477 = vpop.permute.xlu0 %476
    %478 = vrot.lane.b32.xlu0 %v355, 112
    %v479 = vpop.permute.xlu0 %478
    %v480 = vsel %vm188, %v477, %v479
    %v481 = vsel %vm188, %v479, %v477
    %v482 = vld [vmem:[%s191] sm:$0x3]
    %v484 = vlaneseq
    %v485 = vshrl.u32 %v484, 7
    %v486 = vsub.s32 0, %v485
    %v487 = vrot.slane %v482, %v486
    %v488 = vlaneseq
    %v489 = vshrl.u32 %v488, 7
    %v490 = vsub.s32 1, %v489
    %v491 = vrot.slane %v482, %v490
    %v494 = vmul.f32 %v480, %v487
    %v495 = vmul.f32 %v481, %v491
    %496 = vrot.lane.b32.xlu0 %v354, 111
    %v497 = vpop.permute.xlu0 %496
    %498 = vrot.lane.b32.xlu0 %v355, 111
    %v499 = vpop.permute.xlu0 %498
    %v500 = vsel %vm210, %v497, %v499
    %v501 = vsel %vm210, %v499, %v497
    %v502 = vld [vmem:[%s213] sm:$0x3]
    %v504 = vlaneseq
    %v505 = vshrl.u32 %v504, 7
    %v506 = vsub.s32 0, %v505
    %v507 = vrot.slane %v502, %v506
    %v508 = vlaneseq
    %v509 = vshrl.u32 %v508, 7
    %v510 = vsub.s32 1, %v509
    %v511 = vrot.slane %v502, %v510
    %v514 = vmul.f32 %v500, %v507
    %v515 = vmul.f32 %v501, %v511
    %v516 = vld [vmem:[%s4] sm:$0xff]
    %v517 = vld [vmem:[%s4 + $0x8] sm:$0xff]
    %v519 = vsel %vm230, %v516, 0
    %v522 = vsel %vm230, %v517, 0
    %524 = vmatprep.subr.mxu0 %v375
    %525 = vmatpush1.msra.mxu0 %v374
    %526 = vmatprep.subr.mxu0 %v395
    %527 = vmatpush1.msra.mxu0 %v394
    %528 = vmatprep.subr.mxu0 %v415
    %529 = vmatpush1.msra.mxu0 %v414
    %530 = vmatprep.subr.mxu0 %v435
    %531 = vmatpush1.msra.mxu0 %v434
    %532 = vmatprep.subr.mxu0 %v355
    %533 = vmatpush1.msra.mxu0 %v354
    %534 = vmatprep.subr.mxu0 %v455
    %535 = vmatpush1.msra.mxu0 %v454
    %536 = vmatprep.subr.mxu0 %v475
    %537 = vmatpush1.msra.mxu0 %v474
    %538 = vmatprep.subr.mxu0 %v495
    %539 = vmatpush1.msra.mxu0 %v494
    %540 = vmatprep.subr.mxu0 %v515
    %541 = vmatpush1.msra.mxu0 %v514
    %542 = vmatprep.subr.mxu0 0.0
    %543 = vmatpush1.msra.mxu0 0.0
    %544 = vmatprep.subr.mxu0 0.0
    %545 = vmatpush1.msra.mxu0 0.0
    %546 = vmatprep.subr.mxu0 0.0
    %547 = vmatpush1.msra.mxu0 0.0
    %548 = vmatprep.subr.mxu0 0.0
    %549 = vmatpush1.msra.mxu0 0.0
    %550 = vmatprep.subr.mxu0 0.0
    %551 = vmatpush1.msra.mxu0 0.0
    %552 = vmatprep.subr.mxu0 0.0
    %553 = vmatpush1.msra.mxu0 0.0
    %554 = vmatprep.subr.mxu0 0.0
    %555 = vmatpush1.msra.mxu0 0.0
    %556 = vmatprep.subr.mxu0 0.0
    %557 = vmatpush1.msra.mxu0 0.0
    %558 = vmatprep.subr.mxu0 0.0
    %559 = vmatpush1.msra.mxu0 0.0
    %560 = vmatprep.subr.mxu0 0.0
    %561 = vmatpush1.msra.mxu0 0.0
    %562 = vmatprep.subr.mxu0 0.0
    %563 = vmatpush1.msra.mxu0 0.0
    %564 = vmatprep.subr.mxu0 0.0
    %565 = vmatpush1.msra.mxu0 0.0
    %566 = vmatprep.subr.mxu0 0.0
    %567 = vmatpush1.msra.mxu0 0.0
    %568 = vmatprep.subr.mxu0 0.0
    %569 = vmatpush1.msra.mxu0 0.0
    %570 = vmatprep.subr.mxu0 0.0
    %571 = vmatpush1.msra.mxu0 0.0
    %572 = vmatprep.subr.mxu0 0.0
    %573 = vmatpush1.msra.mxu0 0.0
    %574 = vmatprep.subr.mxu0 0.0
    %575 = vmatpush1.msra.mxu0 0.0
    %576 = vmatprep.subr.mxu0 0.0
    %577 = vmatpush1.msra.mxu0 0.0
    %578 = vmatprep.subr.mxu0 0.0
    %579 = vmatpush1.msra.mxu0 0.0
    %580 = vmatprep.subr.mxu0 0.0
    %581 = vmatpush1.msra.mxu0 0.0
    %582 = vmatprep.subr.mxu0 0.0
    %583 = vmatpush1.msra.mxu0 0.0
    %584 = vmatprep.subr.mxu0 0.0
    %585 = vmatpush1.msra.mxu0 0.0
    %586 = vmatprep.subr.mxu0 0.0
    %587 = vmatpush1.msra.mxu0 0.0
    %588 = vmatprep.mubr.f32.mxu0 0.0
    %589 = vmatmul.mubr.f32.gmra.mrb[0].mxu0 %v519
    %v590 = vpop.f32.mrb[0].mxu0
    %v591 = vadd.f32 0.0, %v590
    %v592 = vpop.f32.mrb[0].mxu0
    %v593 = vadd.f32 0.0, %v592
    %594 = vmatprep.mubr.f32.mxu0 0.0
    %595 = vmatmul.mubr.f32.gmra.mrb[0].mxu0 %v522
    %v596 = vpop.f32.mrb[0].mxu0
    %v597 = vadd.f32 0.0, %v596
    %v598 = vpop.f32.mrb[0].mxu0
    %v599 = vadd.f32 0.0, %v598
    %600 = vdwg.mxu0
    %s601 = scalar_lea.vmem %s5, 32
    %602 = vst [vmem:[%s601] sm:$0xff] %v591
    %603 = vst [vmem:[%s601 + $0x8] sm:$0xff] %v593
    %604 = vst [vmem:[%s601 + $0x10] sm:$0xff] %v597
    %605 = vst [vmem:[%s601 + $0x18] sm:$0xff] %v599
    %v606 = vadd.f32 %v591, %v593
    %607 = vadd.xlane.f32.xlu0 %v606
    %v608 = vpop.xlane.xlu0 %607
    %v609 = vadd.f32 %v597, %v599
    %610 = vadd.xlane.f32.xlu0 %v609
    %v611 = vpop.xlane.xlu0 %610
    %v612 = vadd.f32 %v324, %v608
    %v613 = vadd.f32 %v325, %v611
    %v614 = vmul.f32 %v591, %v591
    %v615 = vmul.f32 %v593, %v593
    %v616 = vmul.f32 %v597, %v597
    %v617 = vmul.f32 %v599, %v599
    %v618 = vadd.f32 %v614, %v615
    %619 = vadd.xlane.f32.xlu0 %v618
    %v620 = vpop.xlane.xlu0 %619
    %v621 = vadd.f32 %v616, %v617
    %622 = vadd.xlane.f32.xlu0 %v621
    %v623 = vpop.xlane.xlu0 %622
    %v624 = vadd.f32 %v336, %v620
    %v625 = vadd.f32 %v337, %v623
    %vm626 = vcmask 7168
    %v627 = vsel %vm626, %v612, %v624
    %v628 = vsel %vm626, %v613, %v625
    %vm629 = vcmask 15360
    %630 = vst.msk [vmem:[%s6] sm:$0xff] %vm629, %v627
    %631 = vst.msk [vmem:[%s6 + $0x8] sm:$0xff] %vm629, %v628
    // Predicated region
    $region26: #{triplet_forward.2} parent=1 // pred_check
      _
    $region27: #{triplet_forward.2} parent=1 // pred_check_branch
      %633 = sbr.rel (0) target = $region29
    $region28: #{triplet_forward.2} parent=1 // pred_region
      _
    $region29: #{triplet_forward.2} parent=1 // pred_fallthru
      _
    // Predicated region
    $region30: #{triplet_forward.2} parent=1 // pred_check
      _
    $region31: #{triplet_forward.2} parent=1 // pred_check_branch
      %635 = sbr.rel (0) target = $region33
    $region32: #{triplet_forward.2} parent=1 // pred_region
      _
    $region33: #{triplet_forward.2} parent=1 // pred_fallthru
      _
    // Predicated region
    $region34: #{triplet_forward.2} parent=1 // pred_check
      _
    $region35: #{triplet_forward.2} parent=1 // pred_check_branch
      %637 = sbr.rel (0) target = $region37
    $region36: #{triplet_forward.2} parent=1 // pred_region
      _
    $region37: #{triplet_forward.2} parent=1 // pred_fallthru
      _
    // Predicated region
    $region38: #{triplet_forward.2} parent=1 // pred_check
      _
    $region39: #{triplet_forward.2} parent=1 // pred_check_branch
      %639 = sbr.rel (0) target = $region41
    $region40: #{triplet_forward.2} parent=1 // pred_region
      _
    $region41: #{triplet_forward.2} parent=1 // pred_fallthru
      _
    %640 = vsyncpa [#allocation3], 1

</llo_original>
